<compile_context>
chip_gen: v7x
topology: tpu7x:2x2x1
jax: 0.10.0
libtpu: 0.0.40
codegen_flags: <defaults>
</compile_context>

<pallas_src>
import functools

import jax
import jax.numpy as jnp
from jax import lax
from jax.experimental import pallas as pl
from jax.experimental.pallas import tpu as pltpu

NEG_INF = -1.0e9
BN_EPS = 1e-5


def _pad128(n):
    return ((n + 127) // 128) * 128


def _round_up(n, m):
    return ((n + m - 1) // m) * m


# ---------------------------------------------------------------------------
# Parameter initialization (deterministic, synthetic weights) -- "logical"
# PyTorch-like parameter structure, used both by the reference and the packer.
# ---------------------------------------------------------------------------
def init_params(key, input_dim, hidden_layers, n_nurse, n_doctor):
    def nxt():
        nonlocal key
        key, sub = jax.random.split(key)
        return sub

    def lin(in_f, out_f):
        w = jax.random.normal(nxt(), (in_f, out_f), jnp.float32) / jnp.sqrt(
            jnp.float32(in_f)
        )
        b = jnp.zeros((1, out_f), jnp.float32)
        return w, b

    params = {}

    # --- 3 ClinicalPAN layers ---
    pans = []
    for _ in range(3):
        p = {}
        for i in range(3):  # branch_transforms: Linear(input_dim, 32)
            p[f"br{i}_w"], p[f"br{i}_b"] = lin(input_dim, 32)
        # constraint_attn: Linear(input_dim,64) -> ReLU -> Linear(64,32) -> Sigmoid
        p["ca_w1"], p["ca_b1"] = lin(input_dim, 64)
        p["ca_w2"], p["ca_b2"] = lin(64, 32)
        # constraint_intensity: Linear(input_dim,16) -> ReLU -> Linear(16,1) -> Sigmoid
        p["ci_w1"], p["ci_b1"] = lin(input_dim, 16)
        p["ci_w2"], p["ci_b2"] = lin(16, 1)
        # fusion: Linear(96, input_dim)
        p["fu_w"], p["fu_b"] = lin(32 * 3, input_dim)
        # residual_gate: Linear(input_dim, input_dim) -> Sigmoid
        p["rg_w"], p["rg_b"] = lin(input_dim, input_dim)
        pans.append(p)
    params["pan"] = pans

    # --- shared_layers: [Linear -> BatchNorm1d -> ReLU -> Dropout] ---
    shared = []
    prev = input_dim
    for h in hidden_layers:
        w, b = lin(prev, h)
        bn_scale = jnp.full((1, h), 1.0 / jnp.sqrt(1.0 + BN_EPS), jnp.float32)
        bn_shift = jnp.zeros((1, h), jnp.float32)
        shared.append({"w": w, "b": b, "bn_scale": bn_scale, "bn_shift": bn_shift})
        prev = h
    params["shared"] = shared

    # --- heads ---
    for name, n_out in (("nurse", n_nurse), ("doctor", n_doctor)):
        w1, b1 = lin(prev, 64)
        w2, b2 = lin(64, n_out)
        params[name] = {"w1": w1, "b1": b1, "w2": w2, "b2": b2}
    w1, b1 = lin(prev, 64)
    w2, b2 = lin(64, 1)
    params["wait"] = {"w1": w1, "b1": b1, "w2": w2, "b2": b2}

    return params


# ---------------------------------------------------------------------------
# Offline weight fusion / packing (done once, outside the kernel)
# ---------------------------------------------------------------------------
# Stage-1 fused layout (per PAN layer), 128-lane aligned segments:
#   [  0: 96) branch0|branch1|branch2     (pad to 128)
#   [128:208) constraint_attn L1 (64) | constraint_intensity L1 (16)  (pad to 256)
#   [256:256+D) residual_gate            (pad to 256 + pad128(D))
def pack_params(params, input_dim, hidden_layers, n_nurse, n_doctor):
    D = input_dim
    W1W = 256 + _pad128(D)
    n_tot = n_nurse + n_doctor + 1
    OUT_PAD = _pad128(n_tot)

    pan_w1, pan_w2, pan_fu = [], [], []
    bias_segments = []  # ordered list of (name, (1, w) array)

    for i, p in enumerate(params["pan"]):
        w1 = jnp.zeros((D, W1W), jnp.float32)
        w1 = w1.at[:, 0:32].set(p["br0_w"]).at[:, 32:64].set(p["br1_w"])
        w1 = w1.at[:, 64:96].set(p["br2_w"])
        w1 = w1.at[:, 128:192].set(p["ca_w1"]).at[:, 192:208].set(p["ci_w1"])
        w1 = w1.at[:, 256:256 + D].set(p["rg_w"])
        pan_w1.append(w1)

        b1 = jnp.zeros((1, W1W), jnp.float32)
        b1 = b1.at[:, 0:32].set(p["br0_b"]).at[:, 32:64].set(p["br1_b"])
        b1 = b1.at[:, 64:96].set(p["br2_b"])
        b1 = b1.at[:, 128:192].set(p["ca_b1"]).at[:, 192:208].set(p["ci_b1"])
        b1 = b1.at[:, 256:256 + D].set(p["rg_b"])
        bias_segments.append((f"pan_b1_{i}", b1))

        # block-diagonal second stage: [ca(64)|ci(16)] -> [cw(32)|ci(1)]
        w2 = jnp.zeros((80, 33), jnp.float32)
        w2 = w2.at[0:64, 0:32].set(p["ca_w2"]).at[64:80, 32:33].set(p["ci_w2"])
        pan_w2.append(w2)
        bias_segments.append(
            (f"pan_b2_{i}", jnp.concatenate([p["ca_b2"], p["ci_b2"]], axis=1))
        )

        pan_fu.append(p["fu_w"])
        bias_segments.append((f"pan_fub_{i}", p["fu_b"]))

    # shared layers: fold eval-mode BatchNorm into the Linear
    shared_ws = []
    for j, lp in enumerate(params["shared"]):
        shared_ws.append(lp["w"] * lp["bn_scale"])
        bias_segments.append(
            (f"shared_b_{j}", lp["b"] * lp["bn_scale"] + lp["bn_shift"])
        )

    # heads: fuse the three first Linears, block-diagonal the three second ones
    hw1 = jnp.concatenate(
        [params["nurse"]["w1"], params["doctor"]["w1"], params["wait"]["w1"]], axis=1
    )  # (prev, 192)
    hb1 = jnp.concatenate(
        [params["nurse"]["b1"], params["doctor"]["b1"], params["wait"]["b1"]], axis=1
    )
    bias_segments.append(("head_b1", hb1))

    hw2 = jnp.zeros((192, OUT_PAD), jnp.float32)
    hw2 = hw2.at[0:64, 0:n_nurse].set(params["nurse"]["w2"])
    hw2 = hw2.at[64:128, n_nurse:n_nurse + n_doctor].set(params["doctor"]["w2"])
    hw2 = hw2.at[128:192, n_nurse + n_doctor:n_tot].set(params["wait"]["w2"])
    hb2 = jnp.zeros((1, OUT_PAD), jnp.float32)
    hb2 = hb2.at[:, 0:n_nurse].set(params["nurse"]["b2"])
    hb2 = hb2.at[:, n_nurse:n_nurse + n_doctor].set(params["doctor"]["b2"])
    hb2 = hb2.at[:, n_nurse + n_doctor:n_tot].set(params["wait"]["b2"])
    bias_segments.append(("head_b2", hb2))

    # pack all biases into one lane-aligned (1, TOT) buffer -> one DMA, one ref
    bias_offsets = {}
    pieces = []
    off = 0
    for name, arr in bias_segments:
        w = arr.shape[1]
        bias_offsets[name] = (off, w)
        reserve = _pad128(w)
        pieces.append(jnp.zeros((1, reserve), jnp.float32).at[:, :w].set(arr))
        off += reserve
    bias_buf = jnp.concatenate(pieces, axis=1)

    packed = {
        "pan_w1": jnp.stack(pan_w1),   # (3, D, W1W)
        "pan_w2": jnp.stack(pan_w2),   # (3, 80, 33)
        "pan_fu": jnp.stack(pan_fu),   # (3, 96, D)
        "head_w1": hw1,                # (prev, 192)
        "head_w2": hw2,                # (192, OUT_PAD)
        "bias": bias_buf,              # (1, TOT)
        "shared_w": shared_ws,         # list of (prev, h), BN folded
    }
    cfg = {
        "D": D,
        "n_nurse": n_nurse,
        "n_doctor": n_doctor,
        "out_pad": OUT_PAD,
        "bias_offsets": bias_offsets,
        "n_shared": len(shared_ws),
    }
    return packed, cfg


# ---------------------------------------------------------------------------
# Pallas kernel: full forward pass for one batch tile, everything in VMEM
# ---------------------------------------------------------------------------
def _forward_kernel(cfg, x_ref, pan_w1_ref, pan_w2_ref, pan_fu_ref,
                    head_w1_ref, head_w2_ref, bias_ref, *rest):
    shared_refs = rest[:-1]
    out_ref = rest[-1]

    D = cfg["D"]
    n_n = cfg["n_nurse"]
    n_d = cfg["n_doctor"]
    boff = cfg["bias_offsets"]

    def bload(name):
        o, w = boff[name]
        return bias_ref[:, o:o + w]  # (1, w), static 128-aligned slice

    x = x_ref[...]  # (TB, D)
    # x[:, -4].long() / x[:, -3].long() (capacity columns hold exact int floats)
    s_nurse_max = x[:, D - 4:D - 3].astype(jnp.int32)   # (TB, 1)
    s_doctor_max = x[:, D - 3:D - 2].astype(jnp.int32)  # (TB, 1)

    # --- 3 stacked ClinicalPAN layers (fused matmuls) ---
    h = x
    for i in range(3):
        # one wide matmul replaces 6 small ones
        z1 = jnp.dot(h, pan_w1_ref[i], preferred_element_type=jnp.float32)
        z1 = z1 + bload(f"pan_b1_{i}")                       # (TB, 256 + pad128(D))
        a = jax.nn.relu(z1[:, :256])                         # branches | ca | ci
        rg = jax.nn.sigmoid(z1[:, 256:256 + D])              # residual gate

        # block-diagonal second stage: [ca|ci] -> [cw(32) | intensity(1)]
        z2 = jnp.dot(a[:, 128:208], pan_w2_ref[i],
                     preferred_element_type=jnp.float32) + bload(f"pan_b2_{i}")
        s2 = jax.nn.sigmoid(z2)                              # (TB, 33)
        cw = s2[:, :32]
        ci = s2[:, 32:33]

        # branch outputs are already a contiguous (TB, 96) slice
        fused = a[:, :96] * jnp.concatenate([cw, cw, cw], axis=1) * ci
        fo = jnp.dot(fused, pan_fu_ref[i],
                     preferred_element_type=jnp.float32) + bload(f"pan_fub_{i}")
        h = fo + rg * h                                      # Dropout = identity

    # --- shared layers: Linear (BN folded) -> ReLU -> Dropout(identity) ---
    for j, wref in enumerate(shared_refs):
        h = jax.nn.relu(
            jnp.dot(h, wref[...], preferred_element_type=jnp.float32)
            + bload(f"shared_b_{j}")
        )

    # attention_enabled is False at init -> skip global_attention branch.
    # TODO(synk): nn.MultiheadAttention branch not implemented (never executed).

    # --- heads: one fused (prev,192) matmul + one block-diag (192, OUT_PAD) ---
    z = jax.nn.relu(
        jnp.dot(h, head_w1_ref[...], preferred_element_type=jnp.float32)
        + bload("head_b1")
    )
    slab = jnp.dot(z, head_w2_ref[...], preferred_element_type=jnp.float32)
    slab = slab + bload("head_b2")                           # (TB, OUT_PAD)

    # --- constraint masking on the whole lane-dense slab (single iota/where) ---
    col = lax.broadcasted_iota(jnp.int32, slab.shape, 1)
    in_nurse = col < n_n
    in_doctor = (col >= n_n) & (col < n_n + n_d)
    keep = (in_nurse & (col <= s_nurse_max)) \
         | (in_doctor & ((col - n_n) <= s_doctor_max)) \
         | ((~in_nurse) & (~in_doctor))
    out_ref[...] = jnp.where(keep, slab, jnp.float32(NEG_INF))


def hospital_pan_dnn_forward(x, packed, cfg):
    B, D = x.shape
    OUT_PAD = cfg["out_pad"]
    n_n, n_d = cfg["n_nurse"], cfg["n_doctor"]

    # batch tile: multiple of 8 sublanes, capped at 128; grid over batch
    TB = 128 if B > 128 else _round_up(B, 8)
    B_pad = _round_up(B, TB)
    if B_pad != B:
        x = jnp.pad(x, ((0, B_pad - B), (0, 0)))
    grid = (B_pad // TB,)

    param_arrays = [
        packed["pan_w1"], packed["pan_w2"], packed["pan_fu"],
        packed["head_w1"], packed["head_w2"], packed["bias"],
        *packed["shared_w"],
    ]

    def _resident(a):
        nd = a.ndim
        return pl.BlockSpec(a.shape, lambda i, _nd=nd: (0,) * _nd)

    in_specs = [pl.BlockSpec((TB, D), lambda i: (i, 0))] + [
        _resident(a) for a in param_arrays
    ]
    out_specs = pl.BlockSpec((TB, OUT_PAD), lambda i: (i, 0))

    slab = pl.pallas_call(
        functools.partial(_forward_kernel, cfg),
        out_shape=jax.ShapeDtypeStruct((B_pad, OUT_PAD), jnp.float32),
        grid=grid,
        in_specs=in_specs,
        out_specs=out_specs,
        compiler_params=pltpu.CompilerParams(dimension_semantics=("parallel",)),
    )(x, *param_arrays)

    slab = slab[:B]
    return (slab[:, :n_n],
            slab[:, n_n:n_n + n_d],
            slab[:, n_n + n_d:n_n + n_d + 1])


# ---------------------------------------------------------------------------
# Pure-JAX reference (unfused, logical params) for a correctness check
# ---------------------------------------------------------------------------
def _linear(x, w, b):
    return jnp.dot(x, w, preferred_element_type=jnp.float32) + b


def _pan_forward_ref(x, p):
    ca = jax.nn.relu(_linear(x, p["ca_w1"], p["ca_b1"]))
    constraint_weights = jax.nn.sigmoid(_linear(ca, p["ca_w2"], p["ca_b2"]))
    ci = jax.nn.relu(_linear(x, p["ci_w1"], p["ci_b1"]))
    constraint_intensity = jax.nn.sigmoid(_linear(ci, p["ci_w2"], p["ci_b2"]))
    branches = []
    for i in range(3):
        feat = jax.nn.relu(_linear(x, p[f"br{i}_w"], p[f"br{i}_b"]))
        branches.append(feat * constraint_weights * constraint_intensity)
    fused = jnp.concatenate(branches, axis=1)
    fused_out = _linear(fused, p["fu_w"], p["fu_b"])
    residual_weight = jax.nn.sigmoid(_linear(x, p["rg_w"], p["rg_b"]))
    return fused_out + residual_weight * x


def _head_forward_ref(h, p):
    z = jax.nn.relu(_linear(h, p["w1"], p["b1"]))
    return _linear(z, p["w2"], p["b2"])


def reference_forward(x, params):
    s_nurse_max = x[:, -4:-3].astype(jnp.int32)
    s_doctor_max = x[:, -3:-2].astype(jnp.int32)
    pan_out = x
    for p in params["pan"]:
        pan_out = _pan_forward_ref(pan_out, p)
    h = pan_out
    for lp in params["shared"]:
        h = jax.nn.relu(_linear(h, lp["w"], lp["b"]) * lp["bn_scale"] + lp["bn_shift"])
    nurse = _head_forward_ref(h, params["nurse"])
    doctor = _head_forward_ref(h, params["doctor"])
    wait = _head_forward_ref(h, params["wait"])
    n_mask = (jnp.arange(nurse.shape[1])[None, :] <= s_nurse_max).astype(jnp.float32)
    d_mask = (jnp.arange(doctor.shape[1])[None, :] <= s_doctor_max).astype(jnp.float32)
    nurse = nurse * n_mask + (1.0 - n_mask) * NEG_INF
    doctor = doctor * d_mask + (1.0 - d_mask) * NEG_INF
    return nurse, doctor, wait


if __name__ == "__main__":
    B = 8
    input_dim = 16
    hidden_layers = [32, 32]
    n_nurse_classes = 8
    n_doctor_classes = 8

    key = jax.random.PRNGKey(0)
    kx, kn, kd, kp = jax.random.split(key, 4)

    x = jax.random.normal(kx, (B, input_dim), jnp.float32)
    # columns -4 / -3 carry integer-valued capacity constraints (Smax values)
    nurse_caps = jax.random.randint(kn, (B,), 0, n_nurse_classes).astype(jnp.float32)
    doctor_caps = jax.random.randint(kd, (B,), 0, n_doctor_classes).astype(jnp.float32)
    x = x.at[:, -4].set(nurse_caps)
    x = x.at[:, -3].set(doctor_caps)

    params = init_params(kp, input_dim, hidden_layers, n_nurse_classes, n_doctor_classes)
    packed, cfg = pack_params(params, input_dim, hidden_layers,
                              n_nurse_classes, n_doctor_classes)

    nurse_logits, doctor_logits, wait_pred = jax.block_until_ready(
        hospital_pan_dnn_forward(x, packed, cfg)
    )

    # sanity check against pure-JAX (unfused) reference
    ref_n, ref_d, ref_w = reference_forward(x, params)
    assert jnp.allclose(nurse_logits, ref_n, atol=1e-3, rtol=1e-3)
    assert jnp.allclose(doctor_logits, ref_d, atol=1e-3, rtol=1e-3)
    assert jnp.allclose(wait_pred, ref_w, atol=1e-3, rtol=1e-3)

    print("KERNEL_OK")
</pallas_src>

<mosaic_0001>
module attributes {stable_mosaic.version = 11 : i64} {
  func.func @_forward_kernel(%arg0: i32, %arg1: memref<8x16xf32, #tpu.memory_space<vmem>>, %arg2: memref<3x16x384xf32, #tpu.memory_space<vmem>>, %arg3: memref<3x80x33xf32, #tpu.memory_space<vmem>>, %arg4: memref<3x96x16xf32, #tpu.memory_space<vmem>>, %arg5: memref<32x192xf32, #tpu.memory_space<vmem>>, %arg6: memref<192x128xf32, #tpu.memory_space<vmem>>, %arg7: memref<1x2560xf32, #tpu.memory_space<vmem>>, %arg8: memref<16x32xf32, #tpu.memory_space<vmem>>, %arg9: memref<32x32xf32, #tpu.memory_space<vmem>>, %arg10: memref<8x128xf32, #tpu.memory_space<vmem>>) attributes {dimension_semantics = [#tpu.dimension_semantics<parallel>], iteration_bounds = array<i64: 1>, scalar_prefetch = 0 : i64, scratch_operands = 0 : i64, tpu.core_type = #tpu.core_type<tc>, window_params = [{transform_indices = @transform_0, window_bounds = array<i64: 8, 16>}, {pipeline_mode = #tpu.pipeline_mode<synchronous>, transform_indices = @transform_1, window_bounds = array<i64: 3, 16, 384>}, {pipeline_mode = #tpu.pipeline_mode<synchronous>, transform_indices = @transform_2, window_bounds = array<i64: 3, 80, 33>}, {pipeline_mode = #tpu.pipeline_mode<synchronous>, transform_indices = @transform_3, window_bounds = array<i64: 3, 96, 16>}, {pipeline_mode = #tpu.pipeline_mode<synchronous>, transform_indices = @transform_4, window_bounds = array<i64: 32, 192>}, {pipeline_mode = #tpu.pipeline_mode<synchronous>, transform_indices = @transform_5, window_bounds = array<i64: 192, 128>}, {pipeline_mode = #tpu.pipeline_mode<synchronous>, transform_indices = @transform_6, window_bounds = array<i64: 1, 2560>}, {pipeline_mode = #tpu.pipeline_mode<synchronous>, transform_indices = @transform_7, window_bounds = array<i64: 16, 32>}, {pipeline_mode = #tpu.pipeline_mode<synchronous>, transform_indices = @transform_8, window_bounds = array<i64: 32, 32>}, {transform_indices = @transform_9, window_bounds = array<i64: 8, 128>}]} {
    %c0 = arith.constant 0 : index
    %c0_0 = arith.constant 0 : index
    %0 = vector.load %arg1[%c0, %c0_0] : memref<8x16xf32, #tpu.memory_space<vmem>>, vector<8x16xf32>
    %1 = vector.extract_strided_slice %0 {offsets = [0, 12], sizes = [8, 1], strides = [1, 1]} : vector<8x16xf32> to vector<8x1xf32>
    %2 = arith.fptosi %1 : vector<8x1xf32> to vector<8x1xi32>
    %3 = vector.extract_strided_slice %0 {offsets = [0, 13], sizes = [8, 1], strides = [1, 1]} : vector<8x16xf32> to vector<8x1xf32>
    %4 = arith.fptosi %3 : vector<8x1xf32> to vector<8x1xi32>
    %c0_1 = arith.constant 0 : index
    %c0_2 = arith.constant 0 : index
    %c0_3 = arith.constant 0 : index
    %5 = vector.load %arg2[%c0_1, %c0_2, %c0_3] : memref<3x16x384xf32, #tpu.memory_space<vmem>>, vector<1x16x384xf32>
    %6 = vector.shape_cast %5 : vector<1x16x384xf32> to vector<16x384xf32>
    %cst = arith.constant dense<0.000000e+00> : vector<8x384xf32>
    %7 = tpu.matmul %0, %6, %cst {dimension_numbers = #tpu.dot_dimension_numbers<[1], [0], [0], [1], [0, 0, 1, 1], [], []>} : vector<8x16xf32>, vector<16x384xf32>, vector<8x384xf32> -> vector<8x384xf32>
    %c0_4 = arith.constant 0 : index
    %c0_5 = arith.constant 0 : index
    %8 = vector.load %arg7[%c0_4, %c0_5] : memref<1x2560xf32, #tpu.memory_space<vmem>>, vector<1x384xf32>
    %9 = vector.broadcast %8 : vector<1x384xf32> to vector<8x384xf32>
    %10 = arith.addf %7, %9 : vector<8x384xf32>
    %11 = vector.extract_strided_slice %10 {offsets = [0, 0], sizes = [8, 256], strides = [1, 1]} : vector<8x384xf32> to vector<8x256xf32>
    %cst_6 = arith.constant 0.000000e+00 : f32
    %12 = vector.broadcast %cst_6 : f32 to vector<8x256xf32>
    %13 = arith.maximumf %11, %12 : vector<8x256xf32>
    %14 = vector.extract_strided_slice %10 {offsets = [0, 256], sizes = [8, 16], strides = [1, 1]} : vector<8x384xf32> to vector<8x16xf32>
    %15 = arith.negf %14 : vector<8x16xf32>
    %16 = math.exp %15 : vector<8x16xf32>
    %cst_7 = arith.constant 1.000000e+00 : f32
    %17 = vector.broadcast %cst_7 : f32 to vector<8x16xf32>
    %18 = arith.addf %17, %16 : vector<8x16xf32>
    %19 = arith.divf %17, %18 : vector<8x16xf32>
    %20 = vector.extract_strided_slice %13 {offsets = [0, 128], sizes = [8, 80], strides = [1, 1]} : vector<8x256xf32> to vector<8x80xf32>
    %c0_8 = arith.constant 0 : index
    %c0_9 = arith.constant 0 : index
    %c0_10 = arith.constant 0 : index
    %21 = vector.load %arg3[%c0_8, %c0_9, %c0_10] : memref<3x80x33xf32, #tpu.memory_space<vmem>>, vector<1x80x33xf32>
    %22 = vector.shape_cast %21 : vector<1x80x33xf32> to vector<80x33xf32>
    %cst_11 = arith.constant dense<0.000000e+00> : vector<8x33xf32>
    %23 = tpu.matmul %20, %22, %cst_11 {dimension_numbers = #tpu.dot_dimension_numbers<[1], [0], [0], [1], [0, 0, 1, 1], [], []>} : vector<8x80xf32>, vector<80x33xf32>, vector<8x33xf32> -> vector<8x33xf32>
    %c0_12 = arith.constant 0 : index
    %c384 = arith.constant 384 : index
    %24 = vector.load %arg7[%c0_12, %c384] : memref<1x2560xf32, #tpu.memory_space<vmem>>, vector<1x33xf32>
    %25 = vector.broadcast %24 : vector<1x33xf32> to vector<8x33xf32>
    %26 = arith.addf %23, %25 : vector<8x33xf32>
    %27 = arith.negf %26 : vector<8x33xf32>
    %28 = math.exp %27 : vector<8x33xf32>
    %cst_13 = arith.constant 1.000000e+00 : f32
    %29 = vector.broadcast %cst_13 : f32 to vector<8x33xf32>
    %30 = arith.addf %29, %28 : vector<8x33xf32>
    %31 = arith.divf %29, %30 : vector<8x33xf32>
    %32 = vector.extract_strided_slice %31 {offsets = [0, 0], sizes = [8, 32], strides = [1, 1]} : vector<8x33xf32> to vector<8x32xf32>
    %33 = vector.extract_strided_slice %31 {offsets = [0, 32], sizes = [8, 1], strides = [1, 1]} : vector<8x33xf32> to vector<8x1xf32>
    %34 = vector.extract_strided_slice %13 {offsets = [0, 0], sizes = [8, 96], strides = [1, 1]} : vector<8x256xf32> to vector<8x96xf32>
    %35 = tpu.concatenate %32, %32, %32 in 1 : vector<8x32xf32>, vector<8x32xf32>, vector<8x32xf32> -> vector<8x96xf32>
    %36 = arith.mulf %34, %35 : vector<8x96xf32>
    %37 = vector.broadcast %33 : vector<8x1xf32> to vector<8x96xf32>
    %38 = arith.mulf %36, %37 : vector<8x96xf32>
    %c0_14 = arith.constant 0 : index
    %c0_15 = arith.constant 0 : index
    %c0_16 = arith.constant 0 : index
    %39 = vector.load %arg4[%c0_14, %c0_15, %c0_16] : memref<3x96x16xf32, #tpu.memory_space<vmem>>, vector<1x96x16xf32>
    %40 = vector.shape_cast %39 : vector<1x96x16xf32> to vector<96x16xf32>
    %cst_17 = arith.constant dense<0.000000e+00> : vector<8x16xf32>
    %41 = tpu.matmul %38, %40, %cst_17 {dimension_numbers = #tpu.dot_dimension_numbers<[1], [0], [0], [1], [0, 0, 1, 1], [], []>} : vector<8x96xf32>, vector<96x16xf32>, vector<8x16xf32> -> vector<8x16xf32>
    %c0_18 = arith.constant 0 : index
    %c512 = arith.constant 512 : index
    %42 = vector.load %arg7[%c0_18, %c512] : memref<1x2560xf32, #tpu.memory_space<vmem>>, vector<1x16xf32>
    %43 = vector.broadcast %42 : vector<1x16xf32> to vector<8x16xf32>
    %44 = arith.addf %41, %43 : vector<8x16xf32>
    %45 = arith.mulf %19, %0 : vector<8x16xf32>
    %46 = arith.addf %44, %45 : vector<8x16xf32>
    %c1 = arith.constant 1 : index
    %c0_19 = arith.constant 0 : index
    %c0_20 = arith.constant 0 : index
    %47 = vector.load %arg2[%c1, %c0_19, %c0_20] : memref<3x16x384xf32, #tpu.memory_space<vmem>>, vector<1x16x384xf32>
    %48 = vector.shape_cast %47 : vector<1x16x384xf32> to vector<16x384xf32>
    %cst_21 = arith.constant dense<0.000000e+00> : vector<8x384xf32>
    %49 = tpu.matmul %46, %48, %cst_21 {dimension_numbers = #tpu.dot_dimension_numbers<[1], [0], [0], [1], [0, 0, 1, 1], [], []>} : vector<8x16xf32>, vector<16x384xf32>, vector<8x384xf32> -> vector<8x384xf32>
    %c0_22 = arith.constant 0 : index
    %c640 = arith.constant 640 : index
    %50 = vector.load %arg7[%c0_22, %c640] : memref<1x2560xf32, #tpu.memory_space<vmem>>, vector<1x384xf32>
    %51 = vector.broadcast %50 : vector<1x384xf32> to vector<8x384xf32>
    %52 = arith.addf %49, %51 : vector<8x384xf32>
    %53 = vector.extract_strided_slice %52 {offsets = [0, 0], sizes = [8, 256], strides = [1, 1]} : vector<8x384xf32> to vector<8x256xf32>
    %cst_23 = arith.constant 0.000000e+00 : f32
    %54 = vector.broadcast %cst_23 : f32 to vector<8x256xf32>
    %55 = arith.maximumf %53, %54 : vector<8x256xf32>
    %56 = vector.extract_strided_slice %52 {offsets = [0, 256], sizes = [8, 16], strides = [1, 1]} : vector<8x384xf32> to vector<8x16xf32>
    %57 = arith.negf %56 : vector<8x16xf32>
    %58 = math.exp %57 : vector<8x16xf32>
    %cst_24 = arith.constant 1.000000e+00 : f32
    %59 = vector.broadcast %cst_24 : f32 to vector<8x16xf32>
    %60 = arith.addf %59, %58 : vector<8x16xf32>
    %61 = arith.divf %59, %60 : vector<8x16xf32>
    %62 = vector.extract_strided_slice %55 {offsets = [0, 128], sizes = [8, 80], strides = [1, 1]} : vector<8x256xf32> to vector<8x80xf32>
    %c1_25 = arith.constant 1 : index
    %c0_26 = arith.constant 0 : index
    %c0_27 = arith.constant 0 : index
    %63 = vector.load %arg3[%c1_25, %c0_26, %c0_27] : memref<3x80x33xf32, #tpu.memory_space<vmem>>, vector<1x80x33xf32>
    %64 = vector.shape_cast %63 : vector<1x80x33xf32> to vector<80x33xf32>
    %cst_28 = arith.constant dense<0.000000e+00> : vector<8x33xf32>
    %65 = tpu.matmul %62, %64, %cst_28 {dimension_numbers = #tpu.dot_dimension_numbers<[1], [0], [0], [1], [0, 0, 1, 1], [], []>} : vector<8x80xf32>, vector<80x33xf32>, vector<8x33xf32> -> vector<8x33xf32>
    %c0_29 = arith.constant 0 : index
    %c1024 = arith.constant 1024 : index
    %66 = vector.load %arg7[%c0_29, %c1024] : memref<1x2560xf32, #tpu.memory_space<vmem>>, vector<1x33xf32>
    %67 = vector.broadcast %66 : vector<1x33xf32> to vector<8x33xf32>
    %68 = arith.addf %65, %67 : vector<8x33xf32>
    %69 = arith.negf %68 : vector<8x33xf32>
    %70 = math.exp %69 : vector<8x33xf32>
    %cst_30 = arith.constant 1.000000e+00 : f32
    %71 = vector.broadcast %cst_30 : f32 to vector<8x33xf32>
    %72 = arith.addf %71, %70 : vector<8x33xf32>
    %73 = arith.divf %71, %72 : vector<8x33xf32>
    %74 = vector.extract_strided_slice %73 {offsets = [0, 0], sizes = [8, 32], strides = [1, 1]} : vector<8x33xf32> to vector<8x32xf32>
    %75 = vector.extract_strided_slice %73 {offsets = [0, 32], sizes = [8, 1], strides = [1, 1]} : vector<8x33xf32> to vector<8x1xf32>
    %76 = vector.extract_strided_slice %55 {offsets = [0, 0], sizes = [8, 96], strides = [1, 1]} : vector<8x256xf32> to vector<8x96xf32>
    %77 = tpu.concatenate %74, %74, %74 in 1 : vector<8x32xf32>, vector<8x32xf32>, vector<8x32xf32> -> vector<8x96xf32>
    %78 = arith.mulf %76, %77 : vector<8x96xf32>
    %79 = vector.broadcast %75 : vector<8x1xf32> to vector<8x96xf32>
    %80 = arith.mulf %78, %79 : vector<8x96xf32>
    %c1_31 = arith.constant 1 : index
    %c0_32 = arith.constant 0 : index
    %c0_33 = arith.constant 0 : index
    %81 = vector.load %arg4[%c1_31, %c0_32, %c0_33] : memref<3x96x16xf32, #tpu.memory_space<vmem>>, vector<1x96x16xf32>
    %82 = vector.shape_cast %81 : vector<1x96x16xf32> to vector<96x16xf32>
    %cst_34 = arith.constant dense<0.000000e+00> : vector<8x16xf32>
    %83 = tpu.matmul %80, %82, %cst_34 {dimension_numbers = #tpu.dot_dimension_numbers<[1], [0], [0], [1], [0, 0, 1, 1], [], []>} : vector<8x96xf32>, vector<96x16xf32>, vector<8x16xf32> -> vector<8x16xf32>
    %c0_35 = arith.constant 0 : index
    %c1152 = arith.constant 1152 : index
    %84 = vector.load %arg7[%c0_35, %c1152] : memref<1x2560xf32, #tpu.memory_space<vmem>>, vector<1x16xf32>
    %85 = vector.broadcast %84 : vector<1x16xf32> to vector<8x16xf32>
    %86 = arith.addf %83, %85 : vector<8x16xf32>
    %87 = arith.mulf %61, %46 : vector<8x16xf32>
    %88 = arith.addf %86, %87 : vector<8x16xf32>
    %c2 = arith.constant 2 : index
    %c0_36 = arith.constant 0 : index
    %c0_37 = arith.constant 0 : index
    %89 = vector.load %arg2[%c2, %c0_36, %c0_37] : memref<3x16x384xf32, #tpu.memory_space<vmem>>, vector<1x16x384xf32>
    %90 = vector.shape_cast %89 : vector<1x16x384xf32> to vector<16x384xf32>
    %cst_38 = arith.constant dense<0.000000e+00> : vector<8x384xf32>
    %91 = tpu.matmul %88, %90, %cst_38 {dimension_numbers = #tpu.dot_dimension_numbers<[1], [0], [0], [1], [0, 0, 1, 1], [], []>} : vector<8x16xf32>, vector<16x384xf32>, vector<8x384xf32> -> vector<8x384xf32>
    %c0_39 = arith.constant 0 : index
    %c1280 = arith.constant 1280 : index
    %92 = vector.load %arg7[%c0_39, %c1280] : memref<1x2560xf32, #tpu.memory_space<vmem>>, vector<1x384xf32>
    %93 = vector.broadcast %92 : vector<1x384xf32> to vector<8x384xf32>
    %94 = arith.addf %91, %93 : vector<8x384xf32>
    %95 = vector.extract_strided_slice %94 {offsets = [0, 0], sizes = [8, 256], strides = [1, 1]} : vector<8x384xf32> to vector<8x256xf32>
    %cst_40 = arith.constant 0.000000e+00 : f32
    %96 = vector.broadcast %cst_40 : f32 to vector<8x256xf32>
    %97 = arith.maximumf %95, %96 : vector<8x256xf32>
    %98 = vector.extract_strided_slice %94 {offsets = [0, 256], sizes = [8, 16], strides = [1, 1]} : vector<8x384xf32> to vector<8x16xf32>
    %99 = arith.negf %98 : vector<8x16xf32>
    %100 = math.exp %99 : vector<8x16xf32>
    %cst_41 = arith.constant 1.000000e+00 : f32
    %101 = vector.broadcast %cst_41 : f32 to vector<8x16xf32>
    %102 = arith.addf %101, %100 : vector<8x16xf32>
    %103 = arith.divf %101, %102 : vector<8x16xf32>
    %104 = vector.extract_strided_slice %97 {offsets = [0, 128], sizes = [8, 80], strides = [1, 1]} : vector<8x256xf32> to vector<8x80xf32>
    %c2_42 = arith.constant 2 : index
    %c0_43 = arith.constant 0 : index
    %c0_44 = arith.constant 0 : index
    %105 = vector.load %arg3[%c2_42, %c0_43, %c0_44] : memref<3x80x33xf32, #tpu.memory_space<vmem>>, vector<1x80x33xf32>
    %106 = vector.shape_cast %105 : vector<1x80x33xf32> to vector<80x33xf32>
    %cst_45 = arith.constant dense<0.000000e+00> : vector<8x33xf32>
    %107 = tpu.matmul %104, %106, %cst_45 {dimension_numbers = #tpu.dot_dimension_numbers<[1], [0], [0], [1], [0, 0, 1, 1], [], []>} : vector<8x80xf32>, vector<80x33xf32>, vector<8x33xf32> -> vector<8x33xf32>
    %c0_46 = arith.constant 0 : index
    %c1664 = arith.constant 1664 : index
    %108 = vector.load %arg7[%c0_46, %c1664] : memref<1x2560xf32, #tpu.memory_space<vmem>>, vector<1x33xf32>
    %109 = vector.broadcast %108 : vector<1x33xf32> to vector<8x33xf32>
    %110 = arith.addf %107, %109 : vector<8x33xf32>
    %111 = arith.negf %110 : vector<8x33xf32>
    %112 = math.exp %111 : vector<8x33xf32>
    %cst_47 = arith.constant 1.000000e+00 : f32
    %113 = vector.broadcast %cst_47 : f32 to vector<8x33xf32>
    %114 = arith.addf %113, %112 : vector<8x33xf32>
    %115 = arith.divf %113, %114 : vector<8x33xf32>
    %116 = vector.extract_strided_slice %115 {offsets = [0, 0], sizes = [8, 32], strides = [1, 1]} : vector<8x33xf32> to vector<8x32xf32>
    %117 = vector.extract_strided_slice %115 {offsets = [0, 32], sizes = [8, 1], strides = [1, 1]} : vector<8x33xf32> to vector<8x1xf32>
    %118 = vector.extract_strided_slice %97 {offsets = [0, 0], sizes = [8, 96], strides = [1, 1]} : vector<8x256xf32> to vector<8x96xf32>
    %119 = tpu.concatenate %116, %116, %116 in 1 : vector<8x32xf32>, vector<8x32xf32>, vector<8x32xf32> -> vector<8x96xf32>
    %120 = arith.mulf %118, %119 : vector<8x96xf32>
    %121 = vector.broadcast %117 : vector<8x1xf32> to vector<8x96xf32>
    %122 = arith.mulf %120, %121 : vector<8x96xf32>
    %c2_48 = arith.constant 2 : index
    %c0_49 = arith.constant 0 : index
    %c0_50 = arith.constant 0 : index
    %123 = vector.load %arg4[%c2_48, %c0_49, %c0_50] : memref<3x96x16xf32, #tpu.memory_space<vmem>>, vector<1x96x16xf32>
    %124 = vector.shape_cast %123 : vector<1x96x16xf32> to vector<96x16xf32>
    %cst_51 = arith.constant dense<0.000000e+00> : vector<8x16xf32>
    %125 = tpu.matmul %122, %124, %cst_51 {dimension_numbers = #tpu.dot_dimension_numbers<[1], [0], [0], [1], [0, 0, 1, 1], [], []>} : vector<8x96xf32>, vector<96x16xf32>, vector<8x16xf32> -> vector<8x16xf32>
    %c0_52 = arith.constant 0 : index
    %c1792 = arith.constant 1792 : index
    %126 = vector.load %arg7[%c0_52, %c1792] : memref<1x2560xf32, #tpu.memory_space<vmem>>, vector<1x16xf32>
    %127 = vector.broadcast %126 : vector<1x16xf32> to vector<8x16xf32>
    %128 = arith.addf %125, %127 : vector<8x16xf32>
    %129 = arith.mulf %103, %88 : vector<8x16xf32>
    %130 = arith.addf %128, %129 : vector<8x16xf32>
    %c0_53 = arith.constant 0 : index
    %c0_54 = arith.constant 0 : index
    %131 = vector.load %arg8[%c0_53, %c0_54] : memref<16x32xf32, #tpu.memory_space<vmem>>, vector<16x32xf32>
    %cst_55 = arith.constant dense<0.000000e+00> : vector<8x32xf32>
    %132 = tpu.matmul %130, %131, %cst_55 {dimension_numbers = #tpu.dot_dimension_numbers<[1], [0], [0], [1], [0, 0, 1, 1], [], []>} : vector<8x16xf32>, vector<16x32xf32>, vector<8x32xf32> -> vector<8x32xf32>
    %c0_56 = arith.constant 0 : index
    %c1920 = arith.constant 1920 : index
    %133 = vector.load %arg7[%c0_56, %c1920] : memref<1x2560xf32, #tpu.memory_space<vmem>>, vector<1x32xf32>
    %134 = vector.broadcast %133 : vector<1x32xf32> to vector<8x32xf32>
    %135 = arith.addf %132, %134 : vector<8x32xf32>
    %cst_57 = arith.constant 0.000000e+00 : f32
    %136 = vector.broadcast %cst_57 : f32 to vector<8x32xf32>
    %137 = arith.maximumf %135, %136 : vector<8x32xf32>
    %c0_58 = arith.constant 0 : index
    %c0_59 = arith.constant 0 : index
    %138 = vector.load %arg9[%c0_58, %c0_59] : memref<32x32xf32, #tpu.memory_space<vmem>>, vector<32x32xf32>
    %cst_60 = arith.constant dense<0.000000e+00> : vector<8x32xf32>
    %139 = tpu.matmul %137, %138, %cst_60 {dimension_numbers = #tpu.dot_dimension_numbers<[1], [0], [0], [1], [0, 0, 1, 1], [], []>} : vector<8x32xf32>, vector<32x32xf32>, vector<8x32xf32> -> vector<8x32xf32>
    %c0_61 = arith.constant 0 : index
    %c2048 = arith.constant 2048 : index
    %140 = vector.load %arg7[%c0_61, %c2048] : memref<1x2560xf32, #tpu.memory_space<vmem>>, vector<1x32xf32>
    %141 = vector.broadcast %140 : vector<1x32xf32> to vector<8x32xf32>
    %142 = arith.addf %139, %141 : vector<8x32xf32>
    %cst_62 = arith.constant 0.000000e+00 : f32
    %143 = vector.broadcast %cst_62 : f32 to vector<8x32xf32>
    %144 = arith.maximumf %142, %143 : vector<8x32xf32>
    %c0_63 = arith.constant 0 : index
    %c0_64 = arith.constant 0 : index
    %145 = vector.load %arg5[%c0_63, %c0_64] : memref<32x192xf32, #tpu.memory_space<vmem>>, vector<32x192xf32>
    %cst_65 = arith.constant dense<0.000000e+00> : vector<8x192xf32>
    %146 = tpu.matmul %144, %145, %cst_65 {dimension_numbers = #tpu.dot_dimension_numbers<[1], [0], [0], [1], [0, 0, 1, 1], [], []>} : vector<8x32xf32>, vector<32x192xf32>, vector<8x192xf32> -> vector<8x192xf32>
    %c0_66 = arith.constant 0 : index
    %c2176 = arith.constant 2176 : index
    %147 = vector.load %arg7[%c0_66, %c2176] : memref<1x2560xf32, #tpu.memory_space<vmem>>, vector<1x192xf32>
    %148 = vector.broadcast %147 : vector<1x192xf32> to vector<8x192xf32>
    %149 = arith.addf %146, %148 : vector<8x192xf32>
    %cst_67 = arith.constant 0.000000e+00 : f32
    %150 = vector.broadcast %cst_67 : f32 to vector<8x192xf32>
    %151 = arith.maximumf %149, %150 : vector<8x192xf32>
    %c0_68 = arith.constant 0 : index
    %c0_69 = arith.constant 0 : index
    %152 = vector.load %arg6[%c0_68, %c0_69] : memref<192x128xf32, #tpu.memory_space<vmem>>, vector<192x128xf32>
    %cst_70 = arith.constant dense<0.000000e+00> : vector<8x128xf32>
    %153 = tpu.matmul %151, %152, %cst_70 {dimension_numbers = #tpu.dot_dimension_numbers<[1], [0], [0], [1], [0, 0, 1, 1], [], []>} : vector<8x192xf32>, vector<192x128xf32>, vector<8x128xf32> -> vector<8x128xf32>
    %c0_71 = arith.constant 0 : index
    %c2432 = arith.constant 2432 : index
    %154 = vector.load %arg7[%c0_71, %c2432] : memref<1x2560xf32, #tpu.memory_space<vmem>>, vector<1x128xf32>
    %155 = vector.broadcast %154 : vector<1x128xf32> to vector<8x128xf32>
    %156 = arith.addf %153, %155 : vector<8x128xf32>
    %157 = tpu.iota {dimensions = array<i32: 1>} : vector<8x128xi32>
    %c8_i32 = arith.constant 8 : i32
    %158 = vector.broadcast %c8_i32 : i32 to vector<8x128xi32>
    %159 = arith.cmpi slt, %157, %158 : vector<8x128xi32>
    %c8_i32_72 = arith.constant 8 : i32
    %160 = vector.broadcast %c8_i32_72 : i32 to vector<8x128xi32>
    %161 = arith.cmpi sge, %157, %160 : vector<8x128xi32>
    %c16_i32 = arith.constant 16 : i32
    %162 = vector.broadcast %c16_i32 : i32 to vector<8x128xi32>
    %163 = arith.cmpi slt, %157, %162 : vector<8x128xi32>
    %164 = arith.andi %161, %163 : vector<8x128xi1>
    %165 = vector.broadcast %2 : vector<8x1xi32> to vector<8x128xi32>
    %166 = arith.cmpi sle, %157, %165 : vector<8x128xi32>
    %167 = arith.andi %159, %166 : vector<8x128xi1>
    %c8_i32_73 = arith.constant 8 : i32
    %168 = vector.broadcast %c8_i32_73 : i32 to vector<8x128xi32>
    %169 = arith.subi %157, %168 : vector<8x128xi32>
    %170 = vector.broadcast %4 : vector<8x1xi32> to vector<8x128xi32>
    %171 = arith.cmpi sle, %169, %170 : vector<8x128xi32>
    %172 = arith.andi %164, %171 : vector<8x128xi1>
    %173 = arith.ori %167, %172 : vector<8x128xi1>
    %cst_74 = arith.constant dense<true> : vector<8x128xi1>
    %174 = arith.xori %159, %cst_74 : vector<8x128xi1>
    %cst_75 = arith.constant dense<true> : vector<8x128xi1>
    %175 = arith.xori %164, %cst_75 : vector<8x128xi1>
    %176 = arith.andi %174, %175 : vector<8x128xi1>
    %177 = arith.ori %173, %176 : vector<8x128xi1>
    %cst_76 = arith.constant -1.000000e+09 : f32
    %178 = vector.broadcast %cst_76 : f32 to vector<8x128xf32>
    %179 = arith.select %177, %156, %178 : vector<8x128xi1>, vector<8x128xf32>
    %c0_77 = arith.constant 0 : index
    %c0_78 = arith.constant 0 : index
    %180 = vector.load %arg10[%c0_77, %c0_78] : memref<8x128xf32, #tpu.memory_space<vmem>>, vector<8x128xf32>
    tpu.vector_store %arg10[%c0_77, %c0_78], %179 {strides = array<i32>} : memref<8x128xf32, #tpu.memory_space<vmem>>, vector<8x128xf32>,
    return
  }
  func.func @transform_0(%arg0: i32) -> (i32, i32) {
    %c0_i32 = arith.constant 0 : i32
    %c0_i32_0 = arith.constant 0 : i32
    return %arg0, %c0_i32 : i32, i32
  }
  func.func @transform_1(%arg0: i32) -> (i32, i32, i32) {
    %c0_i32 = arith.constant 0 : i32
    %c0_i32_0 = arith.constant 0 : i32
    %c0_i32_1 = arith.constant 0 : i32
    %c0_i32_2 = arith.constant 0 : i32
    return %c0_i32, %c0_i32_0, %c0_i32_1 : i32, i32, i32
  }
  func.func @transform_2(%arg0: i32) -> (i32, i32, i32) {
    %c0_i32 = arith.constant 0 : i32
    %c0_i32_0 = arith.constant 0 : i32
    %c0_i32_1 = arith.constant 0 : i32
    %c0_i32_2 = arith.constant 0 : i32
    return %c0_i32, %c0_i32_0, %c0_i32_1 : i32, i32, i32
  }
  func.func @transform_3(%arg0: i32) -> (i32, i32, i32) {
    %c0_i32 = arith.constant 0 : i32
    %c0_i32_0 = arith.constant 0 : i32
    %c0_i32_1 = arith.constant 0 : i32
    %c0_i32_2 = arith.constant 0 : i32
    return %c0_i32, %c0_i32_0, %c0_i32_1 : i32, i32, i32
  }
  func.func @transform_4(%arg0: i32) -> (i32, i32) {
    %c0_i32 = arith.constant 0 : i32
    %c0_i32_0 = arith.constant 0 : i32
    %c0_i32_1 = arith.constant 0 : i32
    return %c0_i32, %c0_i32_0 : i32, i32
  }
  func.func @transform_5(%arg0: i32) -> (i32, i32) {
    %c0_i32 = arith.constant 0 : i32
    %c0_i32_0 = arith.constant 0 : i32
    %c0_i32_1 = arith.constant 0 : i32
    return %c0_i32, %c0_i32_0 : i32, i32
  }
  func.func @transform_6(%arg0: i32) -> (i32, i32) {
    %c0_i32 = arith.constant 0 : i32
    %c0_i32_0 = arith.constant 0 : i32
    %c0_i32_1 = arith.constant 0 : i32
    return %c0_i32, %c0_i32_0 : i32, i32
  }
  func.func @transform_7(%arg0: i32) -> (i32, i32) {
    %c0_i32 = arith.constant 0 : i32
    %c0_i32_0 = arith.constant 0 : i32
    %c0_i32_1 = arith.constant 0 : i32
    return %c0_i32, %c0_i32_0 : i32, i32
  }
  func.func @transform_8(%arg0: i32) -> (i32, i32) {
    %c0_i32 = arith.constant 0 : i32
    %c0_i32_0 = arith.constant 0 : i32
    %c0_i32_1 = arith.constant 0 : i32
    return %c0_i32, %c0_i32_0 : i32, i32
  }
  func.func @transform_9(%arg0: i32) -> (i32, i32) {
    %c0_i32 = arith.constant 0 : i32
    %c0_i32_0 = arith.constant 0 : i32
    return %arg0, %c0_i32 : i32, i32
  }
}

</mosaic_0001>

<llo_original>
// kernel: tpu_custom_call.1
$region0: #{tpu_custom_call.1}
  #allocation0 [shape = 'u32[]', space=smem, size = 0x4, offset = 0x4, fixed_abs, tag = 'smem constant byte address 0x4 - core index']
  #allocation1 [shape = 'u32[144,128]{1,0:T(1,128)}', space=vmem, size = 0x12000, scoped, tag = 'internal scratch']
  %s0 = inlined_call_operand.vmem [shape: f32[8,16], index: 0, kind: input, shape index: {}]
  %s1 = inlined_call_operand.vmem [shape: f32[3,16,384], index: 1, kind: input, shape index: {}]
  %s2 = inlined_call_operand.vmem [shape: f32[3,80,33], index: 2, kind: input, shape index: {}]
  %s3 = inlined_call_operand.vmem [shape: f32[3,96,16], index: 3, kind: input, shape index: {}]
  %s4 = inlined_call_operand.vmem [shape: f32[32,192], index: 4, kind: input, shape index: {}]
  %s5 = inlined_call_operand.vmem [shape: f32[192,128], index: 5, kind: input, shape index: {}]
  %s6 = inlined_call_operand.vmem [shape: f32[1,2560], index: 6, kind: input, shape index: {}]
  %s7 = inlined_call_operand.vmem [shape: f32[16,32], index: 7, kind: input, shape index: {}]
  %s8 = inlined_call_operand.vmem [shape: f32[32,32], index: 8, kind: input, shape index: {}]
  %s9 = inlined_call_operand.hbm [shape: f32[8,128], index: 9, kind: output, shape index: {}]
  %s10 = sld [smem:[#allocation0]]
  $region46: #{tpu_custom_call.1} parent=0
    _
  %s12 = ssub.s32 1, %s10
  %s13 = scalar_select 0, %s12, %s10
  $region1: #{tpu_custom_call.1} parent=0
    #allocation2 [shape = 'u8[4096]{0}', space=vmem, size = 0x1000, scoped, tag = 'output window, operand 0, single buffered']
    #allocation3 [shape = 's32[1]{0}', space=sflag, size = 0x4, scoped, tag = 'scoped memory for tpu_custom_call.1']
    %14 = vsyncpa [#allocation3], 0
    // Predicated region
    $region2: #{tpu_custom_call.1} parent=1 // pred_check
      _
    $region3: #{tpu_custom_call.1} parent=1 // pred_check_branch
      %16 = sbr.rel (0) target = $region5
    $region4: #{tpu_custom_call.1} parent=1 // pred_region
      _
    $region5: #{tpu_custom_call.1} parent=1 // pred_fallthru
      _
    // Predicated region
    $region6: #{tpu_custom_call.1} parent=1 // pred_check
      _
    $region7: #{tpu_custom_call.1} parent=1 // pred_check_branch
      %18 = sbr.rel (0) target = $region9
    $region8: #{tpu_custom_call.1} parent=1 // pred_region
      _
    $region9: #{tpu_custom_call.1} parent=1 // pred_fallthru
      _
    // Predicated region
    $region10: #{tpu_custom_call.1} parent=1 // pred_check
      _
    $region11: #{tpu_custom_call.1} parent=1 // pred_check_branch
      %20 = sbr.rel (0) target = $region13
    $region12: #{tpu_custom_call.1} parent=1 // pred_region
      _
    $region13: #{tpu_custom_call.1} parent=1 // pred_fallthru
      _
    // Predicated region
    $region14: #{tpu_custom_call.1} parent=1 // pred_check
      _
    $region15: #{tpu_custom_call.1} parent=1 // pred_check_branch
      %22 = sbr.rel (0) target = $region17
    $region16: #{tpu_custom_call.1} parent=1 // pred_region
      _
    $region17: #{tpu_custom_call.1} parent=1 // pred_fallthru
      _
    // Predicated region
    $region18: #{tpu_custom_call.1} parent=1 // pred_check
      _
    $region19: #{tpu_custom_call.1} parent=1 // pred_check_branch
      %24 = sbr.rel (0) target = $region21
    $region20: #{tpu_custom_call.1} parent=1 // pred_region
      _
    $region21: #{tpu_custom_call.1} parent=1 // pred_fallthru
      _
    // Predicated region
    $region22: #{tpu_custom_call.1} parent=1 // pred_check
      _
    $region23: #{tpu_custom_call.1} parent=1 // pred_check_branch
      %26 = sbr.rel (0) target = $region25
    $region24: #{tpu_custom_call.1} parent=1 // pred_region
      _
    $region25: #{tpu_custom_call.1} parent=1 // pred_fallthru
      _
    // Predicated region
    $region26: #{tpu_custom_call.1} parent=1 // pred_check
      _
    $region27: #{tpu_custom_call.1} parent=1 // pred_check_branch
      %28 = sbr.rel (0) target = $region29
    $region28: #{tpu_custom_call.1} parent=1 // pred_region
      _
    $region29: #{tpu_custom_call.1} parent=1 // pred_fallthru
      _
    // Predicated region
    $region30: #{tpu_custom_call.1} parent=1 // pred_check
      _
    $region31: #{tpu_custom_call.1} parent=1 // pred_check_branch
      %30 = sbr.rel (0) target = $region33
    $region32: #{tpu_custom_call.1} parent=1 // pred_region
      _
    $region33: #{tpu_custom_call.1} parent=1 // pred_fallthru
      _
    // Predicated region
    $region34: #{tpu_custom_call.1} parent=1 // pred_check
      _
    $region35: #{tpu_custom_call.1} parent=1 // pred_check_branch
      %32 = sbr.rel (0) target = $region37
    $region36: #{tpu_custom_call.1} parent=1 // pred_region
      _
    $region37: #{tpu_custom_call.1} parent=1 // pred_fallthru
      _
    %v33 = vld [vmem:[%s0] sm:$0xff]
    %v34 = vcvt.f32.s32.to.zero.pseudo %v33
    %v35 = vld [vmem:[%s1] sm:$0xff]
    %v36 = vld [vmem:[%s1 + $0x8] sm:$0xff]
    %v37 = vld [vmem:[%s1 + $0x10] sm:$0xff]
    %v38 = vld [vmem:[%s1 + $0x18] sm:$0xff]
    %v39 = vld [vmem:[%s1 + $0x20] sm:$0xff]
    %v40 = vld [vmem:[%s1 + $0x28] sm:$0xff]
    %v41 = vld [vmem:[%s6] sm:$0x7]
    %v43 = vlaneseq
    %v44 = vshrl.u32 %v43, 7
    %v45 = vsub.s32 0, %v44
    %v46 = vrot.slane %v41, %v45
    %v47 = vlaneseq
    %v48 = vshrl.u32 %v47, 7
    %v49 = vsub.s32 1, %v48
    %v50 = vrot.slane %v41, %v49
    %v51 = vlaneseq
    %v52 = vshrl.u32 %v51, 7
    %v53 = vsub.s32 2, %v52
    %v54 = vrot.slane %v41, %v53
    %vm58 = vcmask 130048
    %v60 = vsel %vm58, %v33, 0
    %62 = vmatprep.subr.mxu0 %v36
    %63 = vmatpush1.msra.mxu0 %v35
    %64 = vmatprep.subr.mxu0 %v39
    %65 = vmatpush1.msra.mxu0 %v38
    %66 = vmatprep.subr.mxu0 0.0
    %67 = vmatpush1.msra.mxu0 0.0
    %68 = vmatprep.subr.mxu0 0.0
    %69 = vmatpush1.msra.mxu0 0.0
    %70 = vmatprep.subr.mxu0 0.0
    %71 = vmatpush1.msra.mxu0 0.0
    %72 = vmatprep.subr.mxu0 0.0
    %73 = vmatpush1.msra.mxu0 0.0
    %74 = vmatprep.subr.mxu0 0.0
    %75 = vmatpush1.msra.mxu0 0.0
    %76 = vmatprep.subr.mxu0 0.0
    %77 = vmatpush1.msra.mxu0 0.0
    %78 = vmatprep.subr.mxu0 0.0
    %79 = vmatpush1.msra.mxu0 0.0
    %80 = vmatprep.subr.mxu0 0.0
    %81 = vmatpush1.msra.mxu0 0.0
    %82 = vmatprep.subr.mxu0 0.0
    %83 = vmatpush1.msra.mxu0 0.0
    %84 = vmatprep.subr.mxu0 0.0
    %85 = vmatpush1.msra.mxu0 0.0
    %86 = vmatprep.subr.mxu0 0.0
    %87 = vmatpush1.msra.mxu0 0.0
    %88 = vmatprep.subr.mxu0 0.0
    %89 = vmatpush1.msra.mxu0 0.0
    %90 = vmatprep.subr.mxu0 0.0
    %91 = vmatpush1.msra.mxu0 0.0
    %92 = vmatprep.subr.mxu0 0.0
    %93 = vmatpush1.msra.mxu0 0.0
    %94 = vmatprep.subr.mxu0 0.0
    %95 = vmatpush1.msra.mxu0 0.0
    %96 = vmatprep.subr.mxu0 0.0
    %97 = vmatpush1.msra.mxu0 0.0
    %98 = vmatprep.subr.mxu0 0.0
    %99 = vmatpush1.msra.mxu0 0.0
    %100 = vmatprep.subr.mxu0 0.0
    %101 = vmatpush1.msra.mxu0 0.0
    %102 = vmatprep.subr.mxu0 0.0
    %103 = vmatpush1.msra.mxu0 0.0
    %104 = vmatprep.subr.mxu0 0.0
    %105 = vmatpush1.msra.mxu0 0.0
    %106 = vmatprep.subr.mxu0 0.0
    %107 = vmatpush1.msra.mxu0 0.0
    %108 = vmatprep.subr.mxu0 0.0
    %109 = vmatpush1.msra.mxu0 0.0
    %110 = vmatprep.subr.mxu0 0.0
    %111 = vmatpush1.msra.mxu0 0.0
    %112 = vmatprep.subr.mxu0 0.0
    %113 = vmatpush1.msra.mxu0 0.0
    %114 = vmatprep.subr.mxu0 0.0
    %115 = vmatpush1.msra.mxu0 0.0
    %116 = vmatprep.subr.mxu0 0.0
    %117 = vmatpush1.msra.mxu0 0.0
    %118 = vmatprep.subr.mxu0 0.0
    %119 = vmatpush1.msra.mxu0 0.0
    %120 = vmatprep.subr.mxu0 0.0
    %121 = vmatpush1.msra.mxu0 0.0
    %122 = vmatprep.subr.mxu0 0.0
    %123 = vmatpush1.msra.mxu0 0.0
    %124 = vmatprep.subr.mxu0 0.0
    %125 = vmatpush1.msra.mxu0 0.0
    %126 = vmatprep.mubr.f32.mxu0 0.0
    %127 = vmatmul.mubr.f32.gmra.mrb[0].mxu0 %v60
    %v128 = vpop.f32.mrb[0].mxu0
    %v129 = vadd.f32 %v46, %v128
    %v130 = vpop.f32.mrb[0].mxu0
    %v131 = vadd.f32 %v50, %v130
    %132 = vdwg.mxu0
    %133 = vmatprep.subr.mxu0 0.0
    %134 = vmatpush1.msra.mxu0 %v37
    %135 = vmatprep.subr.mxu0 0.0
    %136 = vmatpush1.msra.mxu0 %v40
    %137 = vmatprep.subr.mxu0 0.0
    %138 = vmatpush1.msra.mxu0 0.0
    %139 = vmatprep.subr.mxu0 0.0
    %140 = vmatpush1.msra.mxu0 0.0
    %141 = vmatprep.subr.mxu0 0.0
    %142 = vmatpush1.msra.mxu0 0.0
    %143 = vmatprep.subr.mxu0 0.0
    %144 = vmatpush1.msra.mxu0 0.0
    %145 = vmatprep.subr.mxu0 0.0
    %146 = vmatpush1.msra.mxu0 0.0
    %147 = vmatprep.subr.mxu0 0.0
    %148 = vmatpush1.msra.mxu0 0.0
    %149 = vmatprep.subr.mxu0 0.0
    %150 = vmatpush1.msra.mxu0 0.0
    %151 = vmatprep.subr.mxu0 0.0
    %152 = vmatpush1.msra.mxu0 0.0
    %153 = vmatprep.subr.mxu0 0.0
    %154 = vmatpush1.msra.mxu0 0.0
    %155 = vmatprep.subr.mxu0 0.0
    %156 = vmatpush1.msra.mxu0 0.0
    %157 = vmatprep.subr.mxu0 0.0
    %158 = vmatpush1.msra.mxu0 0.0
    %159 = vmatprep.subr.mxu0 0.0
    %160 = vmatpush1.msra.mxu0 0.0
    %161 = vmatprep.subr.mxu0 0.0
    %162 = vmatpush1.msra.mxu0 0.0
    %163 = vmatprep.subr.mxu0 0.0
    %164 = vmatpush1.msra.mxu0 0.0
    %165 = vmatprep.subr.mxu0 0.0
    %166 = vmatpush1.msra.mxu0 0.0
    %167 = vmatprep.subr.mxu0 0.0
    %168 = vmatpush1.msra.mxu0 0.0
    %169 = vmatprep.subr.mxu0 0.0
    %170 = vmatpush1.msra.mxu0 0.0
    %171 = vmatprep.subr.mxu0 0.0
    %172 = vmatpush1.msra.mxu0 0.0
    %173 = vmatprep.subr.mxu0 0.0
    %174 = vmatpush1.msra.mxu0 0.0
    %175 = vmatprep.subr.mxu0 0.0
    %176 = vmatpush1.msra.mxu0 0.0
    %177 = vmatprep.subr.mxu0 0.0
    %178 = vmatpush1.msra.mxu0 0.0
    %179 = vmatprep.subr.mxu0 0.0
    %180 = vmatpush1.msra.mxu0 0.0
    %181 = vmatprep.subr.mxu0 0.0
    %182 = vmatpush1.msra.mxu0 0.0
    %183 = vmatprep.subr.mxu0 0.0
    %184 = vmatpush1.msra.mxu0 0.0
    %185 = vmatprep.subr.mxu0 0.0
    %186 = vmatpush1.msra.mxu0 0.0
    %187 = vmatprep.subr.mxu0 0.0
    %188 = vmatpush1.msra.mxu0 0.0
    %189 = vmatprep.subr.mxu0 0.0
    %190 = vmatpush1.msra.mxu0 0.0
    %191 = vmatprep.subr.mxu0 0.0
    %192 = vmatpush1.msra.mxu0 0.0
    %193 = vmatprep.subr.mxu0 0.0
    %194 = vmatpush1.msra.mxu0 0.0
    %195 = vmatprep.subr.mxu0 0.0
    %196 = vmatpush1.msra.mxu0 0.0
    %197 = vmatprep.mubr.f32.mxu0 0.0
    %198 = vmatmul.mubr.f32.gmra.mrb[0].mxu0 %v60
    %v199 = vpop.f32.mrb[0].mxu0
    %v200 = vadd.f32 %v54, %v199
    %v201 = vpop.f32.mrb[0].mxu0
    %202 = vdwg.mxu0
    %v203 = vmax.f32 %v129, 0.0
    %v204 = vmax.f32 %v131, 0.0
    %v205 = vxor.u32 %v200, 2147483648
    %v206 = vmul.f32 %v205, 1.442695
    %v207 = vpow.pop %v206
    %v208 = vadd.f32 %v207, 1.0
    %v209 = vrcp.pop %v208
    %v210 = vmul.f32 1.0, %v209
    %v211 = vld [vmem:[%s2] sm:$0xff]
    %v212 = vld [vmem:[%s2 + $0x8] sm:$0xff]
    %v213 = vld [vmem:[%s2 + $0x10] sm:$0xff]
    %v214 = vld [vmem:[%s2 + $0x18] sm:$0xff]
    %v215 = vld [vmem:[%s2 + $0x20] sm:$0xff]
    %v216 = vld [vmem:[%s2 + $0x28] sm:$0xff]
    %v217 = vld [vmem:[%s2 + $0x30] sm:$0xff]
    %v218 = vld [vmem:[%s2 + $0x38] sm:$0xff]
    %v219 = vld [vmem:[%s2 + $0x40] sm:$0xff]
    %v220 = vld [vmem:[%s2 + $0x48] sm:$0xff]
    %v221 = vld [vmem:[%s6 + $0x3] sm:$0x1]
    %v223 = vlaneseq
    %v224 = vshrl.u32 %v223, 7
    %v225 = vsub.s32 0, %v224
    %v226 = vrot.slane %v221, %v225
    %vm228 = vcmask 654336
    %v230 = vsel %vm228, %v204, 0
    %232 = vmatprep.subr.mxu0 0.0
    %233 = vmatpush1.msra.mxu0 %v211
    %234 = vmatprep.subr.mxu0 0.0
    %235 = vmatpush1.msra.mxu0 %v212
    %236 = vmatprep.subr.mxu0 0.0
    %237 = vmatpush1.msra.mxu0 %v213
    %238 = vmatprep.subr.mxu0 0.0
    %239 = vmatpush1.msra.mxu0 %v214
    %240 = vmatprep.subr.mxu0 0.0
    %241 = vmatpush1.msra.mxu0 %v215
    %242 = vmatprep.subr.mxu0 0.0
    %243 = vmatpush1.msra.mxu0 %v216
    %244 = vmatprep.subr.mxu0 0.0
    %245 = vmatpush1.msra.mxu0 %v217
    %246 = vmatprep.subr.mxu0 0.0
    %247 = vmatpush1.msra.mxu0 %v218
    %248 = vmatprep.subr.mxu0 0.0
    %249 = vmatpush1.msra.mxu0 %v219
    %250 = vmatprep.subr.mxu0 0.0
    %251 = vmatpush1.msra.mxu0 %v220
    %252 = vmatprep.subr.mxu0 0.0
    %253 = vmatpush1.msra.mxu0 0.0
    %254 = vmatprep.subr.mxu0 0.0
    %255 = vmatpush1.msra.mxu0 0.0
    %256 = vmatprep.subr.mxu0 0.0
    %257 = vmatpush1.msra.mxu0 0.0
    %258 = vmatprep.subr.mxu0 0.0
    %259 = vmatpush1.msra.mxu0 0.0
    %260 = vmatprep.subr.mxu0 0.0
    %261 = vmatpush1.msra.mxu0 0.0
    %262 = vmatprep.subr.mxu0 0.0
    %263 = vmatpush1.msra.mxu0 0.0
    %264 = vmatprep.subr.mxu0 0.0
    %265 = vmatpush1.msra.mxu0 0.0
    %266 = vmatprep.subr.mxu0 0.0
    %267 = vmatpush1.msra.mxu0 0.0
    %268 = vmatprep.subr.mxu0 0.0
    %269 = vmatpush1.msra.mxu0 0.0
    %270 = vmatprep.subr.mxu0 0.0
    %271 = vmatpush1.msra.mxu0 0.0
    %272 = vmatprep.subr.mxu0 0.0
    %273 = vmatpush1.msra.mxu0 0.0
    %274 = vmatprep.subr.mxu0 0.0
    %275 = vmatpush1.msra.mxu0 0.0
    %276 = vmatprep.subr.mxu0 0.0
    %277 = vmatpush1.msra.mxu0 0.0
    %278 = vmatprep.subr.mxu0 0.0
    %279 = vmatpush1.msra.mxu0 0.0
    %280 = vmatprep.subr.mxu0 0.0
    %281 = vmatpush1.msra.mxu0 0.0
    %282 = vmatprep.subr.mxu0 0.0
    %283 = vmatpush1.msra.mxu0 0.0
    %284 = vmatprep.subr.mxu0 0.0
    %285 = vmatpush1.msra.mxu0 0.0
    %286 = vmatprep.subr.mxu0 0.0
    %287 = vmatpush1.msra.mxu0 0.0
    %288 = vmatprep.subr.mxu0 0.0
    %289 = vmatpush1.msra.mxu0 0.0
    %290 = vmatprep.subr.mxu0 0.0
    %291 = vmatpush1.msra.mxu0 0.0
    %292 = vmatprep.subr.mxu0 0.0
    %293 = vmatpush1.msra.mxu0 0.0
    %294 = vmatprep.subr.mxu0 0.0
    %295 = vmatpush1.msra.mxu0 0.0
    %296 = vmatprep.mubr.f32.mxu0 0.0
    %297 = vmatmul.mubr.f32.gmra.mrb[0].mxu0 %v230
    %v298 = vpop.f32.mrb[0].mxu0
    %v299 = vadd.f32 %v226, %v298
    %v300 = vpop.f32.mrb[0].mxu0
    %301 = vdwg.mxu0
    %v302 = vxor.u32 %v299, 2147483648
    %v303 = vmul.f32 %v302, 1.442695
    %v304 = vpow.pop %v303
    %v305 = vadd.f32 %v304, 1.0
    %v306 = vrcp.pop %v305
    %v307 = vmul.f32 1.0, %v306
    %309 = vrot.lane.b32.xlu0 %v307, 32
    %v310 = vpop.permute.xlu0 %309
    %312 = vrot.lane.b32.xlu0 %v307, 64
    %v313 = vpop.permute.xlu0 %312
    %vm315 = vcmask 261120
    %v316 = vsel %vm315, %v307, %v310
    %vm317 = vcmask 523264
    %v318 = vsel %vm317, %v316, %v313
    %v319 = vmul.f32 %v203, %v318
    %320 = vset.pattern.permute.xlu0 32
    %321 = vperm.xlu0 %320, %v307
    %v322 = vpop.permute.xlu0 %321
    %v324 = vmul.f32 %v319, %v322
    %v325 = vld [vmem:[%s3] sm:$0xff]
    %v326 = vld [vmem:[%s3 + $0x8] sm:$0xff]
    %v327 = vld [vmem:[%s3 + $0x10] sm:$0xff]
    %v328 = vld [vmem:[%s3 + $0x18] sm:$0xff]
    %v329 = vld [vmem:[%s3 + $0x20] sm:$0xff]
    %v330 = vld [vmem:[%s3 + $0x28] sm:$0xff]
    %v331 = vld [vmem:[%s3 + $0x30] sm:$0xff]
    %v332 = vld [vmem:[%s3 + $0x38] sm:$0xff]
    %v333 = vld [vmem:[%s3 + $0x40] sm:$0xff]
    %v334 = vld [vmem:[%s3 + $0x48] sm:$0xff]
    %v335 = vld [vmem:[%s3 + $0x50] sm:$0xff]
    %v336 = vld [vmem:[%s3 + $0x58] sm:$0xff]
    %v337 = vld [vmem:[%s6 + $0x4] sm:$0x1]
    %v339 = vlaneseq
    %v340 = vshrl.u32 %v339, 7
    %v341 = vsub.s32 0, %v340
    %v342 = vrot.slane %v337, %v341
    %vm344 = vcmask 785408
    %v346 = vsel %vm344, %v324, 0
    %348 = vmatprep.subr.mxu0 0.0
    %349 = vmatpush1.msra.mxu0 %v325
    %350 = vmatprep.subr.mxu0 0.0
    %351 = vmatpush1.msra.mxu0 %v326
    %352 = vmatprep.subr.mxu0 0.0
    %353 = vmatpush1.msra.mxu0 %v327
    %354 = vmatprep.subr.mxu0 0.0
    %355 = vmatpush1.msra.mxu0 %v328
    %356 = vmatprep.subr.mxu0 0.0
    %357 = vmatpush1.msra.mxu0 %v329
    %358 = vmatprep.subr.mxu0 0.0
    %359 = vmatpush1.msra.mxu0 %v330
    %360 = vmatprep.subr.mxu0 0.0
    %361 = vmatpush1.msra.mxu0 %v331
    %362 = vmatprep.subr.mxu0 0.0
    %363 = vmatpush1.msra.mxu0 %v332
    %364 = vmatprep.subr.mxu0 0.0
    %365 = vmatpush1.msra.mxu0 %v333
    %366 = vmatprep.subr.mxu0 0.0
    %367 = vmatpush1.msra.mxu0 %v334
    %368 = vmatprep.subr.mxu0 0.0
    %369 = vmatpush1.msra.mxu0 %v335
    %370 = vmatprep.subr.mxu0 0.0
    %371 = vmatpush1.msra.mxu0 %v336
    %372 = vmatprep.subr.mxu0 0.0
    %373 = vmatpush1.msra.mxu0 0.0
    %374 = vmatprep.subr.mxu0 0.0
    %375 = vmatpush1.msra.mxu0 0.0
    %376 = vmatprep.subr.mxu0 0.0
    %377 = vmatpush1.msra.mxu0 0.0
    %378 = vmatprep.subr.mxu0 0.0
    %379 = vmatpush1.msra.mxu0 0.0
    %380 = vmatprep.subr.mxu0 0.0
    %381 = vmatpush1.msra.mxu0 0.0
    %382 = vmatprep.subr.mxu0 0.0
    %383 = vmatpush1.msra.mxu0 0.0
    %384 = vmatprep.subr.mxu0 0.0
    %385 = vmatpush1.msra.mxu0 0.0
    %386 = vmatprep.subr.mxu0 0.0
    %387 = vmatpush1.msra.mxu0 0.0
    %388 = vmatprep.subr.mxu0 0.0
    %389 = vmatpush1.msra.mxu0 0.0
    %390 = vmatprep.subr.mxu0 0.0
    %391 = vmatpush1.msra.mxu0 0.0
    %392 = vmatprep.subr.mxu0 0.0
    %393 = vmatpush1.msra.mxu0 0.0
    %394 = vmatprep.subr.mxu0 0.0
    %395 = vmatpush1.msra.mxu0 0.0
    %396 = vmatprep.subr.mxu0 0.0
    %397 = vmatpush1.msra.mxu0 0.0
    %398 = vmatprep.subr.mxu0 0.0
    %399 = vmatpush1.msra.mxu0 0.0
    %400 = vmatprep.subr.mxu0 0.0
    %401 = vmatpush1.msra.mxu0 0.0
    %402 = vmatprep.subr.mxu0 0.0
    %403 = vmatpush1.msra.mxu0 0.0
    %404 = vmatprep.subr.mxu0 0.0
    %405 = vmatpush1.msra.mxu0 0.0
    %406 = vmatprep.subr.mxu0 0.0
    %407 = vmatpush1.msra.mxu0 0.0
    %408 = vmatprep.subr.mxu0 0.0
    %409 = vmatpush1.msra.mxu0 0.0
    %410 = vmatprep.subr.mxu0 0.0
    %411 = vmatpush1.msra.mxu0 0.0
    %412 = vmatprep.mubr.f32.mxu0 0.0
    %413 = vmatmul.mubr.f32.gmra.mrb[0].mxu0 %v346
    %v414 = vpop.f32.mrb[0].mxu0
    %v415 = vadd.f32 %v342, %v414
    %v416 = vpop.f32.mrb[0].mxu0
    %417 = vdwg.mxu0
    %v418 = vmul.f32 %v210, %v33
    %v419 = vadd.f32 %v415, %v418
    %s420 = scalar_lea.vmem %s1, 48
    %v421 = vld [vmem:[%s420] sm:$0xff]
    %v422 = vld [vmem:[%s420 + $0x8] sm:$0xff]
    %v423 = vld [vmem:[%s420 + $0x10] sm:$0xff]
    %v424 = vld [vmem:[%s420 + $0x18] sm:$0xff]
    %v425 = vld [vmem:[%s420 + $0x20] sm:$0xff]
    %v426 = vld [vmem:[%s420 + $0x28] sm:$0xff]
    %v427 = vld [vmem:[%s6 + $0x5] sm:$0x7]
    %v429 = vlaneseq
    %v430 = vshrl.u32 %v429, 7
    %v431 = vsub.s32 0, %v430
    %v432 = vrot.slane %v427, %v431
    %v433 = vlaneseq
    %v434 = vshrl.u32 %v433, 7
    %v435 = vsub.s32 1, %v434
    %v436 = vrot.slane %v427, %v435
    %v437 = vlaneseq
    %v438 = vshrl.u32 %v437, 7
    %v439 = vsub.s32 2, %v438
    %v440 = vrot.slane %v427, %v439
    %v445 = vsel %vm58, %v419, 0
    %447 = vmatprep.subr.mxu0 %v422
    %448 = vmatpush1.msra.mxu0 %v421
    %449 = vmatprep.subr.mxu0 %v425
    %450 = vmatpush1.msra.mxu0 %v424
    %451 = vmatprep.subr.mxu0 0.0
    %452 = vmatpush1.msra.mxu0 0.0
    %453 = vmatprep.subr.mxu0 0.0
    %454 = vmatpush1.msra.mxu0 0.0
    %455 = vmatprep.subr.mxu0 0.0
    %456 = vmatpush1.msra.mxu0 0.0
    %457 = vmatprep.subr.mxu0 0.0
    %458 = vmatpush1.msra.mxu0 0.0
    %459 = vmatprep.subr.mxu0 0.0
    %460 = vmatpush1.msra.mxu0 0.0
    %461 = vmatprep.subr.mxu0 0.0
    %462 = vmatpush1.msra.mxu0 0.0
    %463 = vmatprep.subr.mxu0 0.0
    %464 = vmatpush1.msra.mxu0 0.0
    %465 = vmatprep.subr.mxu0 0.0
    %466 = vmatpush1.msra.mxu0 0.0
    %467 = vmatprep.subr.mxu0 0.0
    %468 = vmatpush1.msra.mxu0 0.0
    %469 = vmatprep.subr.mxu0 0.0
    %470 = vmatpush1.msra.mxu0 0.0
    %471 = vmatprep.subr.mxu0 0.0
    %472 = vmatpush1.msra.mxu0 0.0
    %473 = vmatprep.subr.mxu0 0.0
    %474 = vmatpush1.msra.mxu0 0.0
    %475 = vmatprep.subr.mxu0 0.0
    %476 = vmatpush1.msra.mxu0 0.0
    %477 = vmatprep.subr.mxu0 0.0
    %478 = vmatpush1.msra.mxu0 0.0
    %479 = vmatprep.subr.mxu0 0.0
    %480 = vmatpush1.msra.mxu0 0.0
    %481 = vmatprep.subr.mxu0 0.0
    %482 = vmatpush1.msra.mxu0 0.0
    %483 = vmatprep.subr.mxu0 0.0
    %484 = vmatpush1.msra.mxu0 0.0
    %485 = vmatprep.subr.mxu0 0.0
    %486 = vmatpush1.msra.mxu0 0.0
    %487 = vmatprep.subr.mxu0 0.0
    %488 = vmatpush1.msra.mxu0 0.0
    %489 = vmatprep.subr.mxu0 0.0
    %490 = vmatpush1.msra.mxu0 0.0
    %491 = vmatprep.subr.mxu0 0.0
    %492 = vmatpush1.msra.mxu0 0.0
    %493 = vmatprep.subr.mxu0 0.0
    %494 = vmatpush1.msra.mxu0 0.0
    %495 = vmatprep.subr.mxu0 0.0
    %496 = vmatpush1.msra.mxu0 0.0
    %497 = vmatprep.subr.mxu0 0.0
    %498 = vmatpush1.msra.mxu0 0.0
    %499 = vmatprep.subr.mxu0 0.0
    %500 = vmatpush1.msra.mxu0 0.0
    %501 = vmatprep.subr.mxu0 0.0
    %502 = vmatpush1.msra.mxu0 0.0
    %503 = vmatprep.subr.mxu0 0.0
    %504 = vmatpush1.msra.mxu0 0.0
    %505 = vmatprep.subr.mxu0 0.0
    %506 = vmatpush1.msra.mxu0 0.0
    %507 = vmatprep.subr.mxu0 0.0
    %508 = vmatpush1.msra.mxu0 0.0
    %509 = vmatprep.subr.mxu0 0.0
    %510 = vmatpush1.msra.mxu0 0.0
    %511 = vmatprep.mubr.f32.mxu0 0.0
    %512 = vmatmul.mubr.f32.gmra.mrb[0].mxu0 %v445
    %v513 = vpop.f32.mrb[0].mxu0
    %v514 = vadd.f32 %v432, %v513
    %v515 = vpop.f32.mrb[0].mxu0
    %v516 = vadd.f32 %v436, %v515
    %517 = vdwg.mxu0
    %518 = vmatprep.subr.mxu0 0.0
    %519 = vmatpush1.msra.mxu0 %v423
    %520 = vmatprep.subr.mxu0 0.0
    %521 = vmatpush1.msra.mxu0 %v426
    %522 = vmatprep.subr.mxu0 0.0
    %523 = vmatpush1.msra.mxu0 0.0
    %524 = vmatprep.subr.mxu0 0.0
    %525 = vmatpush1.msra.mxu0 0.0
    %526 = vmatprep.subr.mxu0 0.0
    %527 = vmatpush1.msra.mxu0 0.0
    %528 = vmatprep.subr.mxu0 0.0
    %529 = vmatpush1.msra.mxu0 0.0
    %530 = vmatprep.subr.mxu0 0.0
    %531 = vmatpush1.msra.mxu0 0.0
    %532 = vmatprep.subr.mxu0 0.0
    %533 = vmatpush1.msra.mxu0 0.0
    %534 = vmatprep.subr.mxu0 0.0
    %535 = vmatpush1.msra.mxu0 0.0
    %536 = vmatprep.subr.mxu0 0.0
    %537 = vmatpush1.msra.mxu0 0.0
    %538 = vmatprep.subr.mxu0 0.0
    %539 = vmatpush1.msra.mxu0 0.0
    %540 = vmatprep.subr.mxu0 0.0
    %541 = vmatpush1.msra.mxu0 0.0
    %542 = vmatprep.subr.mxu0 0.0
    %543 = vmatpush1.msra.mxu0 0.0
    %544 = vmatprep.subr.mxu0 0.0
    %545 = vmatpush1.msra.mxu0 0.0
    %546 = vmatprep.subr.mxu0 0.0
    %547 = vmatpush1.msra.mxu0 0.0
    %548 = vmatprep.subr.mxu0 0.0
    %549 = vmatpush1.msra.mxu0 0.0
    %550 = vmatprep.subr.mxu0 0.0
    %551 = vmatpush1.msra.mxu0 0.0
    %552 = vmatprep.subr.mxu0 0.0
    %553 = vmatpush1.msra.mxu0 0.0
    %554 = vmatprep.subr.mxu0 0.0
    %555 = vmatpush1.msra.mxu0 0.0
    %556 = vmatprep.subr.mxu0 0.0
    %557 = vmatpush1.msra.mxu0 0.0
    %558 = vmatprep.subr.mxu0 0.0
    %559 = vmatpush1.msra.mxu0 0.0
    %560 = vmatprep.subr.mxu0 0.0
    %561 = vmatpush1.msra.mxu0 0.0
    %562 = vmatprep.subr.mxu0 0.0
    %563 = vmatpush1.msra.mxu0 0.0
    %564 = vmatprep.subr.mxu0 0.0
    %565 = vmatpush1.msra.mxu0 0.0
    %566 = vmatprep.subr.mxu0 0.0
    %567 = vmatpush1.msra.mxu0 0.0
    %568 = vmatprep.subr.mxu0 0.0
    %569 = vmatpush1.msra.mxu0 0.0
    %570 = vmatprep.subr.mxu0 0.0
    %571 = vmatpush1.msra.mxu0 0.0
    %572 = vmatprep.subr.mxu0 0.0
    %573 = vmatpush1.msra.mxu0 0.0
    %574 = vmatprep.subr.mxu0 0.0
    %575 = vmatpush1.msra.mxu0 0.0
    %576 = vmatprep.subr.mxu0 0.0
    %577 = vmatpush1.msra.mxu0 0.0
    %578 = vmatprep.subr.mxu0 0.0
    %579 = vmatpush1.msra.mxu0 0.0
    %580 = vmatprep.subr.mxu0 0.0
    %581 = vmatpush1.msra.mxu0 0.0
    %582 = vmatprep.mubr.f32.mxu0 0.0
    %583 = vmatmul.mubr.f32.gmra.mrb[0].mxu0 %v445
    %v584 = vpop.f32.mrb[0].mxu0
    %v585 = vadd.f32 %v440, %v584
    %v586 = vpop.f32.mrb[0].mxu0
    %587 = vdwg.mxu0
    %v588 = vmax.f32 %v514, 0.0
    %v589 = vmax.f32 %v516, 0.0
    %v590 = vxor.u32 %v585, 2147483648
    %v591 = vmul.f32 %v590, 1.442695
    %v592 = vpow.pop %v591
    %v593 = vadd.f32 %v592, 1.0
    %v594 = vrcp.pop %v593
    %v595 = vmul.f32 1.0, %v594
    %s596 = scalar_lea.vmem %s2, 80
    %v597 = vld [vmem:[%s596] sm:$0xff]
    %v598 = vld [vmem:[%s596 + $0x8] sm:$0xff]
    %v599 = vld [vmem:[%s596 + $0x10] sm:$0xff]
    %v600 = vld [vmem:[%s596 + $0x18] sm:$0xff]
    %v601 = vld [vmem:[%s596 + $0x20] sm:$0xff]
    %v602 = vld [vmem:[%s596 + $0x28] sm:$0xff]
    %v603 = vld [vmem:[%s596 + $0x30] sm:$0xff]
    %v604 = vld [vmem:[%s596 + $0x38] sm:$0xff]
    %v605 = vld [vmem:[%s596 + $0x40] sm:$0xff]
    %v606 = vld [vmem:[%s596 + $0x48] sm:$0xff]
    %v607 = vld [vmem:[%s6 + $0x8] sm:$0x1]
    %v609 = vlaneseq
    %v610 = vshrl.u32 %v609, 7
    %v611 = vsub.s32 0, %v610
    %v612 = vrot.slane %v607, %v611
    %v615 = vsel %vm228, %v589, 0
    %617 = vmatprep.subr.mxu0 0.0
    %618 = vmatpush1.msra.mxu0 %v597
    %619 = vmatprep.subr.mxu0 0.0
    %620 = vmatpush1.msra.mxu0 %v598
    %621 = vmatprep.subr.mxu0 0.0
    %622 = vmatpush1.msra.mxu0 %v599
    %623 = vmatprep.subr.mxu0 0.0
    %624 = vmatpush1.msra.mxu0 %v600
    %625 = vmatprep.subr.mxu0 0.0
    %626 = vmatpush1.msra.mxu0 %v601
    %627 = vmatprep.subr.mxu0 0.0
    %628 = vmatpush1.msra.mxu0 %v602
    %629 = vmatprep.subr.mxu0 0.0
    %630 = vmatpush1.msra.mxu0 %v603
    %631 = vmatprep.subr.mxu0 0.0
    %632 = vmatpush1.msra.mxu0 %v604
    %633 = vmatprep.subr.mxu0 0.0
    %634 = vmatpush1.msra.mxu0 %v605
    %635 = vmatprep.subr.mxu0 0.0
    %636 = vmatpush1.msra.mxu0 %v606
    %637 = vmatprep.subr.mxu0 0.0
    %638 = vmatpush1.msra.mxu0 0.0
    %639 = vmatprep.subr.mxu0 0.0
    %640 = vmatpush1.msra.mxu0 0.0
    %641 = vmatprep.subr.mxu0 0.0
    %642 = vmatpush1.msra.mxu0 0.0
    %643 = vmatprep.subr.mxu0 0.0
    %644 = vmatpush1.msra.mxu0 0.0
    %645 = vmatprep.subr.mxu0 0.0
    %646 = vmatpush1.msra.mxu0 0.0
    %647 = vmatprep.subr.mxu0 0.0
    %648 = vmatpush1.msra.mxu0 0.0
    %649 = vmatprep.subr.mxu0 0.0
    %650 = vmatpush1.msra.mxu0 0.0
    %651 = vmatprep.subr.mxu0 0.0
    %652 = vmatpush1.msra.mxu0 0.0
    %653 = vmatprep.subr.mxu0 0.0
    %654 = vmatpush1.msra.mxu0 0.0
    %655 = vmatprep.subr.mxu0 0.0
    %656 = vmatpush1.msra.mxu0 0.0
    %657 = vmatprep.subr.mxu0 0.0
    %658 = vmatpush1.msra.mxu0 0.0
    %659 = vmatprep.subr.mxu0 0.0
    %660 = vmatpush1.msra.mxu0 0.0
    %661 = vmatprep.subr.mxu0 0.0
    %662 = vmatpush1.msra.mxu0 0.0
    %663 = vmatprep.subr.mxu0 0.0
    %664 = vmatpush1.msra.mxu0 0.0
    %665 = vmatprep.subr.mxu0 0.0
    %666 = vmatpush1.msra.mxu0 0.0
    %667 = vmatprep.subr.mxu0 0.0
    %668 = vmatpush1.msra.mxu0 0.0
    %669 = vmatprep.subr.mxu0 0.0
    %670 = vmatpush1.msra.mxu0 0.0
    %671 = vmatprep.subr.mxu0 0.0
    %672 = vmatpush1.msra.mxu0 0.0
    %673 = vmatprep.subr.mxu0 0.0
    %674 = vmatpush1.msra.mxu0 0.0
    %675 = vmatprep.subr.mxu0 0.0
    %676 = vmatpush1.msra.mxu0 0.0
    %677 = vmatprep.subr.mxu0 0.0
    %678 = vmatpush1.msra.mxu0 0.0
    %679 = vmatprep.subr.mxu0 0.0
    %680 = vmatpush1.msra.mxu0 0.0
    %681 = vmatprep.mubr.f32.mxu0 0.0
    %682 = vmatmul.mubr.f32.gmra.mrb[0].mxu0 %v615
    %v683 = vpop.f32.mrb[0].mxu0
    %v684 = vadd.f32 %v612, %v683
    %v685 = vpop.f32.mrb[0].mxu0
    %686 = vdwg.mxu0
    %v687 = vxor.u32 %v684, 2147483648
    %v688 = vmul.f32 %v687, 1.442695
    %v689 = vpow.pop %v688
    %v690 = vadd.f32 %v689, 1.0
    %v691 = vrcp.pop %v690
    %v692 = vmul.f32 1.0, %v691
    %694 = vrot.lane.b32.xlu0 %v692, 32
    %v695 = vpop.permute.xlu0 %694
    %697 = vrot.lane.b32.xlu0 %v692, 64
    %v698 = vpop.permute.xlu0 %697
    %v700 = vsel %vm315, %v692, %v695
    %v701 = vsel %vm317, %v700, %v698
    %v702 = vmul.f32 %v588, %v701
    %703 = vset.pattern.permute.xlu0 32
    %704 = vperm.xlu0 %703, %v692
    %v705 = vpop.permute.xlu0 %704
    %v707 = vmul.f32 %v702, %v705
    %s708 = scalar_lea.vmem %s3, 96
    %v709 = vld [vmem:[%s708] sm:$0xff]
    %v710 = vld [vmem:[%s708 + $0x8] sm:$0xff]
    %v711 = vld [vmem:[%s708 + $0x10] sm:$0xff]
    %v712 = vld [vmem:[%s708 + $0x18] sm:$0xff]
    %v713 = vld [vmem:[%s708 + $0x20] sm:$0xff]
    %v714 = vld [vmem:[%s708 + $0x28] sm:$0xff]
    %v715 = vld [vmem:[%s708 + $0x30] sm:$0xff]
    %v716 = vld [vmem:[%s708 + $0x38] sm:$0xff]
    %v717 = vld [vmem:[%s708 + $0x40] sm:$0xff]
    %v718 = vld [vmem:[%s708 + $0x48] sm:$0xff]
    %v719 = vld [vmem:[%s708 + $0x50] sm:$0xff]
    %v720 = vld [vmem:[%s708 + $0x58] sm:$0xff]
    %v721 = vld [vmem:[%s6 + $0x9] sm:$0x1]
    %v723 = vlaneseq
    %v724 = vshrl.u32 %v723, 7
    %v725 = vsub.s32 0, %v724
    %v726 = vrot.slane %v721, %v725
    %v729 = vsel %vm344, %v707, 0
    %731 = vmatprep.subr.mxu0 0.0
    %732 = vmatpush1.msra.mxu0 %v709
    %733 = vmatprep.subr.mxu0 0.0
    %734 = vmatpush1.msra.mxu0 %v710
    %735 = vmatprep.subr.mxu0 0.0
    %736 = vmatpush1.msra.mxu0 %v711
    %737 = vmatprep.subr.mxu0 0.0
    %738 = vmatpush1.msra.mxu0 %v712
    %739 = vmatprep.subr.mxu0 0.0
    %740 = vmatpush1.msra.mxu0 %v713
    %741 = vmatprep.subr.mxu0 0.0
    %742 = vmatpush1.msra.mxu0 %v714
    %743 = vmatprep.subr.mxu0 0.0
    %744 = vmatpush1.msra.mxu0 %v715
    %745 = vmatprep.subr.mxu0 0.0
    %746 = vmatpush1.msra.mxu0 %v716
    %747 = vmatprep.subr.mxu0 0.0
    %748 = vmatpush1.msra.mxu0 %v717
    %749 = vmatprep.subr.mxu0 0.0
    %750 = vmatpush1.msra.mxu0 %v718
    %751 = vmatprep.subr.mxu0 0.0
    %752 = vmatpush1.msra.mxu0 %v719
    %753 = vmatprep.subr.mxu0 0.0
    %754 = vmatpush1.msra.mxu0 %v720
    %755 = vmatprep.subr.mxu0 0.0
    %756 = vmatpush1.msra.mxu0 0.0
    %757 = vmatprep.subr.mxu0 0.0
    %758 = vmatpush1.msra.mxu0 0.0
    %759 = vmatprep.subr.mxu0 0.0
    %760 = vmatpush1.msra.mxu0 0.0
    %761 = vmatprep.subr.mxu0 0.0
    %762 = vmatpush1.msra.mxu0 0.0
    %763 = vmatprep.subr.mxu0 0.0
    %764 = vmatpush1.msra.mxu0 0.0
    %765 = vmatprep.subr.mxu0 0.0
    %766 = vmatpush1.msra.mxu0 0.0
    %767 = vmatprep.subr.mxu0 0.0
    %768 = vmatpush1.msra.mxu0 0.0
    %769 = vmatprep.subr.mxu0 0.0
    %770 = vmatpush1.msra.mxu0 0.0
    %771 = vmatprep.subr.mxu0 0.0
    %772 = vmatpush1.msra.mxu0 0.0
    %773 = vmatprep.subr.mxu0 0.0
    %774 = vmatpush1.msra.mxu0 0.0
    %775 = vmatprep.subr.mxu0 0.0
    %776 = vmatpush1.msra.mxu0 0.0
    %777 = vmatprep.subr.mxu0 0.0
    %778 = vmatpush1.msra.mxu0 0.0
    %779 = vmatprep.subr.mxu0 0.0
    %780 = vmatpush1.msra.mxu0 0.0
    %781 = vmatprep.subr.mxu0 0.0
    %782 = vmatpush1.msra.mxu0 0.0
    %783 = vmatprep.subr.mxu0 0.0
    %784 = vmatpush1.msra.mxu0 0.0
    %785 = vmatprep.subr.mxu0 0.0
    %786 = vmatpush1.msra.mxu0 0.0
    %787 = vmatprep.subr.mxu0 0.0
    %788 = vmatpush1.msra.mxu0 0.0
    %789 = vmatprep.subr.mxu0 0.0
    %790 = vmatpush1.msra.mxu0 0.0
    %791 = vmatprep.subr.mxu0 0.0
    %792 = vmatpush1.msra.mxu0 0.0
    %793 = vmatprep.subr.mxu0 0.0
    %794 = vmatpush1.msra.mxu0 0.0
    %795 = vmatprep.mubr.f32.mxu0 0.0
    %796 = vmatmul.mubr.f32.gmra.mrb[0].mxu0 %v729
    %v797 = vpop.f32.mrb[0].mxu0
    %v798 = vadd.f32 %v726, %v797
    %v799 = vpop.f32.mrb[0].mxu0
    %800 = vdwg.mxu0
    %v801 = vmul.f32 %v595, %v419
    %v802 = vadd.f32 %v798, %v801
    %s803 = scalar_lea.vmem %s1, 96
    %v804 = vld [vmem:[%s803] sm:$0xff]
    %v805 = vld [vmem:[%s803 + $0x8] sm:$0xff]
    %v806 = vld [vmem:[%s803 + $0x10] sm:$0xff]
    %v807 = vld [vmem:[%s803 + $0x18] sm:$0xff]
    %v808 = vld [vmem:[%s803 + $0x20] sm:$0xff]
    %v809 = vld [vmem:[%s803 + $0x28] sm:$0xff]
    %v810 = vld [vmem:[%s6 + $0xa] sm:$0x7]
    %v812 = vlaneseq
    %v813 = vshrl.u32 %v812, 7
    %v814 = vsub.s32 0, %v813
    %v815 = vrot.slane %v810, %v814
    %v816 = vlaneseq
    %v817 = vshrl.u32 %v816, 7
    %v818 = vsub.s32 1, %v817
    %v819 = vrot.slane %v810, %v818
    %v820 = vlaneseq
    %v821 = vshrl.u32 %v820, 7
    %v822 = vsub.s32 2, %v821
    %v823 = vrot.slane %v810, %v822
    %v828 = vsel %vm58, %v802, 0
    %830 = vmatprep.subr.mxu0 %v805
    %831 = vmatpush1.msra.mxu0 %v804
    %832 = vmatprep.subr.mxu0 %v808
    %833 = vmatpush1.msra.mxu0 %v807
    %834 = vmatprep.subr.mxu0 0.0
    %835 = vmatpush1.msra.mxu0 0.0
    %836 = vmatprep.subr.mxu0 0.0
    %837 = vmatpush1.msra.mxu0 0.0
    %838 = vmatprep.subr.mxu0 0.0
    %839 = vmatpush1.msra.mxu0 0.0
    %840 = vmatprep.subr.mxu0 0.0
    %841 = vmatpush1.msra.mxu0 0.0
    %842 = vmatprep.subr.mxu0 0.0
    %843 = vmatpush1.msra.mxu0 0.0
    %844 = vmatprep.subr.mxu0 0.0
    %845 = vmatpush1.msra.mxu0 0.0
    %846 = vmatprep.subr.mxu0 0.0
    %847 = vmatpush1.msra.mxu0 0.0
    %848 = vmatprep.subr.mxu0 0.0
    %849 = vmatpush1.msra.mxu0 0.0
    %850 = vmatprep.subr.mxu0 0.0
    %851 = vmatpush1.msra.mxu0 0.0
    %852 = vmatprep.subr.mxu0 0.0
    %853 = vmatpush1.msra.mxu0 0.0
    %854 = vmatprep.subr.mxu0 0.0
    %855 = vmatpush1.msra.mxu0 0.0
    %856 = vmatprep.subr.mxu0 0.0
    %857 = vmatpush1.msra.mxu0 0.0
    %858 = vmatprep.subr.mxu0 0.0
    %859 = vmatpush1.msra.mxu0 0.0
    %860 = vmatprep.subr.mxu0 0.0
    %861 = vmatpush1.msra.mxu0 0.0
    %862 = vmatprep.subr.mxu0 0.0
    %863 = vmatpush1.msra.mxu0 0.0
    %864 = vmatprep.subr.mxu0 0.0
    %865 = vmatpush1.msra.mxu0 0.0
    %866 = vmatprep.subr.mxu0 0.0
    %867 = vmatpush1.msra.mxu0 0.0
    %868 = vmatprep.subr.mxu0 0.0
    %869 = vmatpush1.msra.mxu0 0.0
    %870 = vmatprep.subr.mxu0 0.0
    %871 = vmatpush1.msra.mxu0 0.0
    %872 = vmatprep.subr.mxu0 0.0
    %873 = vmatpush1.msra.mxu0 0.0
    %874 = vmatprep.subr.mxu0 0.0
    %875 = vmatpush1.msra.mxu0 0.0
    %876 = vmatprep.subr.mxu0 0.0
    %877 = vmatpush1.msra.mxu0 0.0
    %878 = vmatprep.subr.mxu0 0.0
    %879 = vmatpush1.msra.mxu0 0.0
    %880 = vmatprep.subr.mxu0 0.0
    %881 = vmatpush1.msra.mxu0 0.0
    %882 = vmatprep.subr.mxu0 0.0
    %883 = vmatpush1.msra.mxu0 0.0
    %884 = vmatprep.subr.mxu0 0.0
    %885 = vmatpush1.msra.mxu0 0.0
    %886 = vmatprep.subr.mxu0 0.0
    %887 = vmatpush1.msra.mxu0 0.0
    %888 = vmatprep.subr.mxu0 0.0
    %889 = vmatpush1.msra.mxu0 0.0
    %890 = vmatprep.subr.mxu0 0.0
    %891 = vmatpush1.msra.mxu0 0.0
    %892 = vmatprep.subr.mxu0 0.0
    %893 = vmatpush1.msra.mxu0 0.0
    %894 = vmatprep.mubr.f32.mxu0 0.0
    %895 = vmatmul.mubr.f32.gmra.mrb[0].mxu0 %v828
    %v896 = vpop.f32.mrb[0].mxu0
    %v897 = vadd.f32 %v815, %v896
    %v898 = vpop.f32.mrb[0].mxu0
    %v899 = vadd.f32 %v819, %v898
    %900 = vdwg.mxu0
    %901 = vmatprep.subr.mxu0 0.0
    %902 = vmatpush1.msra.mxu0 %v806
    %903 = vmatprep.subr.mxu0 0.0
    %904 = vmatpush1.msra.mxu0 %v809
    %905 = vmatprep.subr.mxu0 0.0
    %906 = vmatpush1.msra.mxu0 0.0
    %907 = vmatprep.subr.mxu0 0.0
    %908 = vmatpush1.msra.mxu0 0.0
    %909 = vmatprep.subr.mxu0 0.0
    %910 = vmatpush1.msra.mxu0 0.0
    %911 = vmatprep.subr.mxu0 0.0
    %912 = vmatpush1.msra.mxu0 0.0
    %913 = vmatprep.subr.mxu0 0.0
    %914 = vmatpush1.msra.mxu0 0.0
    %915 = vmatprep.subr.mxu0 0.0
    %916 = vmatpush1.msra.mxu0 0.0
    %917 = vmatprep.subr.mxu0 0.0
    %918 = vmatpush1.msra.mxu0 0.0
    %919 = vmatprep.subr.mxu0 0.0
    %920 = vmatpush1.msra.mxu0 0.0
    %921 = vmatprep.subr.mxu0 0.0
    %922 = vmatpush1.msra.mxu0 0.0
    %923 = vmatprep.subr.mxu0 0.0
    %924 = vmatpush1.msra.mxu0 0.0
    %925 = vmatprep.subr.mxu0 0.0
    %926 = vmatpush1.msra.mxu0 0.0
    %927 = vmatprep.subr.mxu0 0.0
    %928 = vmatpush1.msra.mxu0 0.0
    %929 = vmatprep.subr.mxu0 0.0
    %930 = vmatpush1.msra.mxu0 0.0
    %931 = vmatprep.subr.mxu0 0.0
    %932 = vmatpush1.msra.mxu0 0.0
    %933 = vmatprep.subr.mxu0 0.0
    %934 = vmatpush1.msra.mxu0 0.0
    %935 = vmatprep.subr.mxu0 0.0
    %936 = vmatpush1.msra.mxu0 0.0
    %937 = vmatprep.subr.mxu0 0.0
    %938 = vmatpush1.msra.mxu0 0.0
    %939 = vmatprep.subr.mxu0 0.0
    %940 = vmatpush1.msra.mxu0 0.0
    %941 = vmatprep.subr.mxu0 0.0
    %942 = vmatpush1.msra.mxu0 0.0
    %943 = vmatprep.subr.mxu0 0.0
    %944 = vmatpush1.msra.mxu0 0.0
    %945 = vmatprep.subr.mxu0 0.0
    %946 = vmatpush1.msra.mxu0 0.0
    %947 = vmatprep.subr.mxu0 0.0
    %948 = vmatpush1.msra.mxu0 0.0
    %949 = vmatprep.subr.mxu0 0.0
    %950 = vmatpush1.msra.mxu0 0.0
    %951 = vmatprep.subr.mxu0 0.0
    %952 = vmatpush1.msra.mxu0 0.0
    %953 = vmatprep.subr.mxu0 0.0
    %954 = vmatpush1.msra.mxu0 0.0
    %955 = vmatprep.subr.mxu0 0.0
    %956 = vmatpush1.msra.mxu0 0.0
    %957 = vmatprep.subr.mxu0 0.0
    %958 = vmatpush1.msra.mxu0 0.0
    %959 = vmatprep.subr.mxu0 0.0
    %960 = vmatpush1.msra.mxu0 0.0
    %961 = vmatprep.subr.mxu0 0.0
    %962 = vmatpush1.msra.mxu0 0.0
    %963 = vmatprep.subr.mxu0 0.0
    %964 = vmatpush1.msra.mxu0 0.0
    %965 = vmatprep.mubr.f32.mxu0 0.0
    %966 = vmatmul.mubr.f32.gmra.mrb[0].mxu0 %v828
    %v967 = vpop.f32.mrb[0].mxu0
    %v968 = vadd.f32 %v823, %v967
    %v969 = vpop.f32.mrb[0].mxu0
    %970 = vdwg.mxu0
    %v971 = vmax.f32 %v897, 0.0
    %v972 = vmax.f32 %v899, 0.0
    %v973 = vxor.u32 %v968, 2147483648
    %v974 = vmul.f32 %v973, 1.442695
    %v975 = vpow.pop %v974
    %v976 = vadd.f32 %v975, 1.0
    %v977 = vrcp.pop %v976
    %v978 = vmul.f32 1.0, %v977
    %s979 = scalar_lea.vmem %s2, 160
    %v980 = vld [vmem:[%s979] sm:$0xff]
    %v981 = vld [vmem:[%s979 + $0x8] sm:$0xff]
    %v982 = vld [vmem:[%s979 + $0x10] sm:$0xff]
    %v983 = vld [vmem:[%s979 + $0x18] sm:$0xff]
    %v984 = vld [vmem:[%s979 + $0x20] sm:$0xff]
    %v985 = vld [vmem:[%s979 + $0x28] sm:$0xff]
    %v986 = vld [vmem:[%s979 + $0x30] sm:$0xff]
    %v987 = vld [vmem:[%s979 + $0x38] sm:$0xff]
    %v988 = vld [vmem:[%s979 + $0x40] sm:$0xff]
    %v989 = vld [vmem:[%s979 + $0x48] sm:$0xff]
    %v990 = vld [vmem:[%s6 + $0xd] sm:$0x1]
    %v992 = vlaneseq
    %v993 = vshrl.u32 %v992, 7
    %v994 = vsub.s32 0, %v993
    %v995 = vrot.slane %v990, %v994
    %v998 = vsel %vm228, %v972, 0
    %1000 = vmatprep.subr.mxu0 0.0
    %1001 = vmatpush1.msra.mxu0 %v980
    %1002 = vmatprep.subr.mxu0 0.0
    %1003 = vmatpush1.msra.mxu0 %v981
    %1004 = vmatprep.subr.mxu0 0.0
    %1005 = vmatpush1.msra.mxu0 %v982
    %1006 = vmatprep.subr.mxu0 0.0
    %1007 = vmatpush1.msra.mxu0 %v983
    %1008 = vmatprep.subr.mxu0 0.0
    %1009 = vmatpush1.msra.mxu0 %v984
    %1010 = vmatprep.subr.mxu0 0.0
    %1011 = vmatpush1.msra.mxu0 %v985
    %1012 = vmatprep.subr.mxu0 0.0
    %1013 = vmatpush1.msra.mxu0 %v986
    %1014 = vmatprep.subr.mxu0 0.0
    %1015 = vmatpush1.msra.mxu0 %v987
    %1016 = vmatprep.subr.mxu0 0.0
    %1017 = vmatpush1.msra.mxu0 %v988
    %1018 = vmatprep.subr.mxu0 0.0
    %1019 = vmatpush1.msra.mxu0 %v989
    %1020 = vmatprep.subr.mxu0 0.0
    %1021 = vmatpush1.msra.mxu0 0.0
    %1022 = vmatprep.subr.mxu0 0.0
    %1023 = vmatpush1.msra.mxu0 0.0
    %1024 = vmatprep.subr.mxu0 0.0
    %1025 = vmatpush1.msra.mxu0 0.0
    %1026 = vmatprep.subr.mxu0 0.0
    %1027 = vmatpush1.msra.mxu0 0.0
    %1028 = vmatprep.subr.mxu0 0.0
    %1029 = vmatpush1.msra.mxu0 0.0
    %1030 = vmatprep.subr.mxu0 0.0
    %1031 = vmatpush1.msra.mxu0 0.0
    %1032 = vmatprep.subr.mxu0 0.0
    %1033 = vmatpush1.msra.mxu0 0.0
    %1034 = vmatprep.subr.mxu0 0.0
    %1035 = vmatpush1.msra.mxu0 0.0
    %1036 = vmatprep.subr.mxu0 0.0
    %1037 = vmatpush1.msra.mxu0 0.0
    %1038 = vmatprep.subr.mxu0 0.0
    %1039 = vmatpush1.msra.mxu0 0.0
    %1040 = vmatprep.subr.mxu0 0.0
    %1041 = vmatpush1.msra.mxu0 0.0
    %1042 = vmatprep.subr.mxu0 0.0
    %1043 = vmatpush1.msra.mxu0 0.0
    %1044 = vmatprep.subr.mxu0 0.0
    %1045 = vmatpush1.msra.mxu0 0.0
    %1046 = vmatprep.subr.mxu0 0.0
    %1047 = vmatpush1.msra.mxu0 0.0
    %1048 = vmatprep.subr.mxu0 0.0
    %1049 = vmatpush1.msra.mxu0 0.0
    %1050 = vmatprep.subr.mxu0 0.0
    %1051 = vmatpush1.msra.mxu0 0.0
    %1052 = vmatprep.subr.mxu0 0.0
    %1053 = vmatpush1.msra.mxu0 0.0
    %1054 = vmatprep.subr.mxu0 0.0
    %1055 = vmatpush1.msra.mxu0 0.0
    %1056 = vmatprep.subr.mxu0 0.0
    %1057 = vmatpush1.msra.mxu0 0.0
    %1058 = vmatprep.subr.mxu0 0.0
    %1059 = vmatpush1.msra.mxu0 0.0
    %1060 = vmatprep.subr.mxu0 0.0
    %1061 = vmatpush1.msra.mxu0 0.0
    %1062 = vmatprep.subr.mxu0 0.0
    %1063 = vmatpush1.msra.mxu0 0.0
    %1064 = vmatprep.mubr.f32.mxu0 0.0
    %1065 = vmatmul.mubr.f32.gmra.mrb[0].mxu0 %v998
    %v1066 = vpop.f32.mrb[0].mxu0
    %v1067 = vadd.f32 %v995, %v1066
    %v1068 = vpop.f32.mrb[0].mxu0
    %1069 = vdwg.mxu0
    %v1070 = vxor.u32 %v1067, 2147483648
    %v1071 = vmul.f32 %v1070, 1.442695
    %v1072 = vpow.pop %v1071
    %v1073 = vadd.f32 %v1072, 1.0
    %v1074 = vrcp.pop %v1073
    %v1075 = vmul.f32 1.0, %v1074
    %1077 = vrot.lane.b32.xlu0 %v1075, 32
    %v1078 = vpop.permute.xlu0 %1077
    %1080 = vrot.lane.b32.xlu0 %v1075, 64
    %v1081 = vpop.permute.xlu0 %1080
    %v1083 = vsel %vm315, %v1075, %v1078
    %v1084 = vsel %vm317, %v1083, %v1081
    %v1085 = vmul.f32 %v971, %v1084
    %1086 = vset.pattern.permute.xlu0 32
    %1087 = vperm.xlu0 %1086, %v1075
    %v1088 = vpop.permute.xlu0 %1087
    %v1090 = vmul.f32 %v1085, %v1088
    %s1091 = scalar_lea.vmem %s3, 192
    %v1092 = vld [vmem:[%s1091] sm:$0xff]
    %v1093 = vld [vmem:[%s1091 + $0x8] sm:$0xff]
    %v1094 = vld [vmem:[%s1091 + $0x10] sm:$0xff]
    %v1095 = vld [vmem:[%s1091 + $0x18] sm:$0xff]
    %v1096 = vld [vmem:[%s1091 + $0x20] sm:$0xff]
    %v1097 = vld [vmem:[%s1091 + $0x28] sm:$0xff]
    %v1098 = vld [vmem:[%s1091 + $0x30] sm:$0xff]
    %v1099 = vld [vmem:[%s1091 + $0x38] sm:$0xff]
    %v1100 = vld [vmem:[%s1091 + $0x40] sm:$0xff]
    %v1101 = vld [vmem:[%s1091 + $0x48] sm:$0xff]
    %v1102 = vld [vmem:[%s1091 + $0x50] sm:$0xff]
    %v1103 = vld [vmem:[%s1091 + $0x58] sm:$0xff]
    %v1104 = vld [vmem:[%s6 + $0xe] sm:$0x1]
    %v1106 = vlaneseq
    %v1107 = vshrl.u32 %v1106, 7
    %v1108 = vsub.s32 0, %v1107
    %v1109 = vrot.slane %v1104, %v1108
    %v1112 = vsel %vm344, %v1090, 0
    %1114 = vmatprep.subr.mxu0 0.0
    %1115 = vmatpush1.msra.mxu0 %v1092
    %1116 = vmatprep.subr.mxu0 0.0
    %1117 = vmatpush1.msra.mxu0 %v1093
    %1118 = vmatprep.subr.mxu0 0.0
    %1119 = vmatpush1.msra.mxu0 %v1094
    %1120 = vmatprep.subr.mxu0 0.0
    %1121 = vmatpush1.msra.mxu0 %v1095
    %1122 = vmatprep.subr.mxu0 0.0
    %1123 = vmatpush1.msra.mxu0 %v1096
    %1124 = vmatprep.subr.mxu0 0.0
    %1125 = vmatpush1.msra.mxu0 %v1097
    %1126 = vmatprep.subr.mxu0 0.0
    %1127 = vmatpush1.msra.mxu0 %v1098
    %1128 = vmatprep.subr.mxu0 0.0
    %1129 = vmatpush1.msra.mxu0 %v1099
    %1130 = vmatprep.subr.mxu0 0.0
    %1131 = vmatpush1.msra.mxu0 %v1100
    %1132 = vmatprep.subr.mxu0 0.0
    %1133 = vmatpush1.msra.mxu0 %v1101
    %1134 = vmatprep.subr.mxu0 0.0
    %1135 = vmatpush1.msra.mxu0 %v1102
    %1136 = vmatprep.subr.mxu0 0.0
    %1137 = vmatpush1.msra.mxu0 %v1103
    %1138 = vmatprep.subr.mxu0 0.0
    %1139 = vmatpush1.msra.mxu0 0.0
    %1140 = vmatprep.subr.mxu0 0.0
    %1141 = vmatpush1.msra.mxu0 0.0
    %1142 = vmatprep.subr.mxu0 0.0
    %1143 = vmatpush1.msra.mxu0 0.0
    %1144 = vmatprep.subr.mxu0 0.0
    %1145 = vmatpush1.msra.mxu0 0.0
    %1146 = vmatprep.subr.mxu0 0.0
    %1147 = vmatpush1.msra.mxu0 0.0
    %1148 = vmatprep.subr.mxu0 0.0
    %1149 = vmatpush1.msra.mxu0 0.0
    %1150 = vmatprep.subr.mxu0 0.0
    %1151 = vmatpush1.msra.mxu0 0.0
    %1152 = vmatprep.subr.mxu0 0.0
    %1153 = vmatpush1.msra.mxu0 0.0
    %1154 = vmatprep.subr.mxu0 0.0
    %1155 = vmatpush1.msra.mxu0 0.0
    %1156 = vmatprep.subr.mxu0 0.0
    %1157 = vmatpush1.msra.mxu0 0.0
    %1158 = vmatprep.subr.mxu0 0.0
    %1159 = vmatpush1.msra.mxu0 0.0
    %1160 = vmatprep.subr.mxu0 0.0
    %1161 = vmatpush1.msra.mxu0 0.0
    %1162 = vmatprep.subr.mxu0 0.0
    %1163 = vmatpush1.msra.mxu0 0.0
    %1164 = vmatprep.subr.mxu0 0.0
    %1165 = vmatpush1.msra.mxu0 0.0
    %1166 = vmatprep.subr.mxu0 0.0
    %1167 = vmatpush1.msra.mxu0 0.0
    %1168 = vmatprep.subr.mxu0 0.0
    %1169 = vmatpush1.msra.mxu0 0.0
    %1170 = vmatprep.subr.mxu0 0.0
    %1171 = vmatpush1.msra.mxu0 0.0
    %1172 = vmatprep.subr.mxu0 0.0
    %1173 = vmatpush1.msra.mxu0 0.0
    %1174 = vmatprep.subr.mxu0 0.0
    %1175 = vmatpush1.msra.mxu0 0.0
    %1176 = vmatprep.subr.mxu0 0.0
    %1177 = vmatpush1.msra.mxu0 0.0
    %1178 = vmatprep.mubr.f32.mxu0 0.0
    %1179 = vmatmul.mubr.f32.gmra.mrb[0].mxu0 %v1112
    %v1180 = vpop.f32.mrb[0].mxu0
    %v1181 = vadd.f32 %v1109, %v1180
    %v1182 = vpop.f32.mrb[0].mxu0
    %1183 = vdwg.mxu0
    %v1184 = vmul.f32 %v978, %v802
    %v1185 = vadd.f32 %v1181, %v1184
    %v1186 = vld [vmem:[%s7] sm:$0xff]
    %v1187 = vld [vmem:[%s7 + $0x8] sm:$0xff]
    %v1188 = vld [vmem:[%s6 + $0xf] sm:$0x1]
    %v1190 = vlaneseq
    %v1191 = vshrl.u32 %v1190, 7
    %v1192 = vsub.s32 0, %v1191
    %v1193 = vrot.slane %v1188, %v1192
    %v1196 = vsel %vm58, %v1185, 0
    %1198 = vmatprep.subr.mxu0 0.0
    %1199 = vmatpush1.msra.mxu0 %v1186
    %1200 = vmatprep.subr.mxu0 0.0
    %1201 = vmatpush1.msra.mxu0 %v1187
    %1202 = vmatprep.subr.mxu0 0.0
    %1203 = vmatpush1.msra.mxu0 0.0
    %1204 = vmatprep.subr.mxu0 0.0
    %1205 = vmatpush1.msra.mxu0 0.0
    %1206 = vmatprep.subr.mxu0 0.0
    %1207 = vmatpush1.msra.mxu0 0.0
    %1208 = vmatprep.subr.mxu0 0.0
    %1209 = vmatpush1.msra.mxu0 0.0
    %1210 = vmatprep.subr.mxu0 0.0
    %1211 = vmatpush1.msra.mxu0 0.0
    %1212 = vmatprep.subr.mxu0 0.0
    %1213 = vmatpush1.msra.mxu0 0.0
    %1214 = vmatprep.subr.mxu0 0.0
    %1215 = vmatpush1.msra.mxu0 0.0
    %1216 = vmatprep.subr.mxu0 0.0
    %1217 = vmatpush1.msra.mxu0 0.0
    %1218 = vmatprep.subr.mxu0 0.0
    %1219 = vmatpush1.msra.mxu0 0.0
    %1220 = vmatprep.subr.mxu0 0.0
    %1221 = vmatpush1.msra.mxu0 0.0
    %1222 = vmatprep.subr.mxu0 0.0
    %1223 = vmatpush1.msra.mxu0 0.0
    %1224 = vmatprep.subr.mxu0 0.0
    %1225 = vmatpush1.msra.mxu0 0.0
    %1226 = vmatprep.subr.mxu0 0.0
    %1227 = vmatpush1.msra.mxu0 0.0
    %1228 = vmatprep.subr.mxu0 0.0
    %1229 = vmatpush1.msra.mxu0 0.0
    %1230 = vmatprep.subr.mxu0 0.0
    %1231 = vmatpush1.msra.mxu0 0.0
    %1232 = vmatprep.subr.mxu0 0.0
    %1233 = vmatpush1.msra.mxu0 0.0
    %1234 = vmatprep.subr.mxu0 0.0
    %1235 = vmatpush1.msra.mxu0 0.0
    %1236 = vmatprep.subr.mxu0 0.0
    %1237 = vmatpush1.msra.mxu0 0.0
    %1238 = vmatprep.subr.mxu0 0.0
    %1239 = vmatpush1.msra.mxu0 0.0
    %1240 = vmatprep.subr.mxu0 0.0
    %1241 = vmatpush1.msra.mxu0 0.0
    %1242 = vmatprep.subr.mxu0 0.0
    %1243 = vmatpush1.msra.mxu0 0.0
    %1244 = vmatprep.subr.mxu0 0.0
    %1245 = vmatpush1.msra.mxu0 0.0
    %1246 = vmatprep.subr.mxu0 0.0
    %1247 = vmatpush1.msra.mxu0 0.0
    %1248 = vmatprep.subr.mxu0 0.0
    %1249 = vmatpush1.msra.mxu0 0.0
    %1250 = vmatprep.subr.mxu0 0.0
    %1251 = vmatpush1.msra.mxu0 0.0
    %1252 = vmatprep.subr.mxu0 0.0
    %1253 = vmatpush1.msra.mxu0 0.0
    %1254 = vmatprep.subr.mxu0 0.0
    %1255 = vmatpush1.msra.mxu0 0.0
    %1256 = vmatprep.subr.mxu0 0.0
    %1257 = vmatpush1.msra.mxu0 0.0
    %1258 = vmatprep.subr.mxu0 0.0
    %1259 = vmatpush1.msra.mxu0 0.0
    %1260 = vmatprep.subr.mxu0 0.0
    %1261 = vmatpush1.msra.mxu0 0.0
    %1262 = vmatprep.mubr.f32.mxu0 0.0
    %1263 = vmatmul.mubr.f32.gmra.mrb[0].mxu0 %v1196
    %v1264 = vpop.f32.mrb[0].mxu0
    %v1265 = vadd.f32 %v1193, %v1264
    %v1266 = vpop.f32.mrb[0].mxu0
    %1267 = vdwg.mxu0
    %v1268 = vmax.f32 %v1265, 0.0
    %v1269 = vld [vmem:[%s8] sm:$0xff]
    %v1270 = vld [vmem:[%s8 + $0x8] sm:$0xff]
    %v1271 = vld [vmem:[%s8 + $0x10] sm:$0xff]
    %v1272 = vld [vmem:[%s8 + $0x18] sm:$0xff]
    %v1273 = vld [vmem:[%s6 + $0x10] sm:$0x1]
    %v1275 = vlaneseq
    %v1276 = vshrl.u32 %v1275, 7
    %v1277 = vsub.s32 0, %v1276
    %v1278 = vrot.slane %v1273, %v1277
    %v1281 = vsel %vm315, %v1268, 0
    %1283 = vmatprep.subr.mxu0 0.0
    %1284 = vmatpush1.msra.mxu0 %v1269
    %1285 = vmatprep.subr.mxu0 0.0
    %1286 = vmatpush1.msra.mxu0 %v1270
    %1287 = vmatprep.subr.mxu0 0.0
    %1288 = vmatpush1.msra.mxu0 %v1271
    %1289 = vmatprep.subr.mxu0 0.0
    %1290 = vmatpush1.msra.mxu0 %v1272
    %1291 = vmatprep.subr.mxu0 0.0
    %1292 = vmatpush1.msra.mxu0 0.0
    %1293 = vmatprep.subr.mxu0 0.0
    %1294 = vmatpush1.msra.mxu0 0.0
    %1295 = vmatprep.subr.mxu0 0.0
    %1296 = vmatpush1.msra.mxu0 0.0
    %1297 = vmatprep.subr.mxu0 0.0
    %1298 = vmatpush1.msra.mxu0 0.0
    %1299 = vmatprep.subr.mxu0 0.0
    %1300 = vmatpush1.msra.mxu0 0.0
    %1301 = vmatprep.subr.mxu0 0.0
    %1302 = vmatpush1.msra.mxu0 0.0
    %1303 = vmatprep.subr.mxu0 0.0
    %1304 = vmatpush1.msra.mxu0 0.0
    %1305 = vmatprep.subr.mxu0 0.0
    %1306 = vmatpush1.msra.mxu0 0.0
    %1307 = vmatprep.subr.mxu0 0.0
    %1308 = vmatpush1.msra.mxu0 0.0
    %1309 = vmatprep.subr.mxu0 0.0
    %1310 = vmatpush1.msra.mxu0 0.0
    %1311 = vmatprep.subr.mxu0 0.0
    %1312 = vmatpush1.msra.mxu0 0.0
    %1313 = vmatprep.subr.mxu0 0.0
    %1314 = vmatpush1.msra.mxu0 0.0
    %1315 = vmatprep.subr.mxu0 0.0
    %1316 = vmatpush1.msra.mxu0 0.0
    %1317 = vmatprep.subr.mxu0 0.0
    %1318 = vmatpush1.msra.mxu0 0.0
    %1319 = vmatprep.subr.mxu0 0.0
    %1320 = vmatpush1.msra.mxu0 0.0
    %1321 = vmatprep.subr.mxu0 0.0
    %1322 = vmatpush1.msra.mxu0 0.0
    %1323 = vmatprep.subr.mxu0 0.0
    %1324 = vmatpush1.msra.mxu0 0.0
    %1325 = vmatprep.subr.mxu0 0.0
    %1326 = vmatpush1.msra.mxu0 0.0
    %1327 = vmatprep.subr.mxu0 0.0
    %1328 = vmatpush1.msra.mxu0 0.0
    %1329 = vmatprep.subr.mxu0 0.0
    %1330 = vmatpush1.msra.mxu0 0.0
    %1331 = vmatprep.subr.mxu0 0.0
    %1332 = vmatpush1.msra.mxu0 0.0
    %1333 = vmatprep.subr.mxu0 0.0
    %1334 = vmatpush1.msra.mxu0 0.0
    %1335 = vmatprep.subr.mxu0 0.0
    %1336 = vmatpush1.msra.mxu0 0.0
    %1337 = vmatprep.subr.mxu0 0.0
    %1338 = vmatpush1.msra.mxu0 0.0
    %1339 = vmatprep.subr.mxu0 0.0
    %1340 = vmatpush1.msra.mxu0 0.0
    %1341 = vmatprep.subr.mxu0 0.0
    %1342 = vmatpush1.msra.mxu0 0.0
    %1343 = vmatprep.subr.mxu0 0.0
    %1344 = vmatpush1.msra.mxu0 0.0
    %1345 = vmatprep.subr.mxu0 0.0
    %1346 = vmatpush1.msra.mxu0 0.0
    %1347 = vmatprep.mubr.f32.mxu0 0.0
    %1348 = vmatmul.mubr.f32.gmra.mrb[0].mxu0 %v1281
    %v1349 = vpop.f32.mrb[0].mxu0
    %v1350 = vadd.f32 %v1278, %v1349
    %v1351 = vpop.f32.mrb[0].mxu0
    %1352 = vdwg.mxu0
    %v1353 = vmax.f32 %v1350, 0.0
    %v1354 = vld [vmem:[%s4] sm:$0xff]
    %v1355 = vld [vmem:[%s4 + $0x8] sm:$0xff]
    %v1356 = vld [vmem:[%s4 + $0x10] sm:$0xff]
    %v1357 = vld [vmem:[%s4 + $0x18] sm:$0xff]
    %v1358 = vld [vmem:[%s4 + $0x20] sm:$0xff]
    %v1359 = vld [vmem:[%s4 + $0x28] sm:$0xff]
    %v1360 = vld [vmem:[%s4 + $0x30] sm:$0xff]
    %v1361 = vld [vmem:[%s4 + $0x38] sm:$0xff]
    %v1362 = vld [vmem:[%s6 + $0x11] sm:$0x3]
    %v1364 = vlaneseq
    %v1365 = vshrl.u32 %v1364, 7
    %v1366 = vsub.s32 0, %v1365
    %v1367 = vrot.slane %v1362, %v1366
    %v1368 = vlaneseq
    %v1369 = vshrl.u32 %v1368, 7
    %v1370 = vsub.s32 1, %v1369
    %v1371 = vrot.slane %v1362, %v1370
    %v1375 = vsel %vm315, %v1353, 0
    %1377 = vmatprep.subr.mxu0 %v1355
    %1378 = vmatpush1.msra.mxu0 %v1354
    %1379 = vmatprep.subr.mxu0 %v1357
    %1380 = vmatpush1.msra.mxu0 %v1356
    %1381 = vmatprep.subr.mxu0 %v1359
    %1382 = vmatpush1.msra.mxu0 %v1358
    %1383 = vmatprep.subr.mxu0 %v1361
    %1384 = vmatpush1.msra.mxu0 %v1360
    %1385 = vmatprep.subr.mxu0 0.0
    %1386 = vmatpush1.msra.mxu0 0.0
    %1387 = vmatprep.subr.mxu0 0.0
    %1388 = vmatpush1.msra.mxu0 0.0
    %1389 = vmatprep.subr.mxu0 0.0
    %1390 = vmatpush1.msra.mxu0 0.0
    %1391 = vmatprep.subr.mxu0 0.0
    %1392 = vmatpush1.msra.mxu0 0.0
    %1393 = vmatprep.subr.mxu0 0.0
    %1394 = vmatpush1.msra.mxu0 0.0
    %1395 = vmatprep.subr.mxu0 0.0
    %1396 = vmatpush1.msra.mxu0 0.0
    %1397 = vmatprep.subr.mxu0 0.0
    %1398 = vmatpush1.msra.mxu0 0.0
    %1399 = vmatprep.subr.mxu0 0.0
    %1400 = vmatpush1.msra.mxu0 0.0
    %1401 = vmatprep.subr.mxu0 0.0
    %1402 = vmatpush1.msra.mxu0 0.0
    %1403 = vmatprep.subr.mxu0 0.0
    %1404 = vmatpush1.msra.mxu0 0.0
    %1405 = vmatprep.subr.mxu0 0.0
    %1406 = vmatpush1.msra.mxu0 0.0
    %1407 = vmatprep.subr.mxu0 0.0
    %1408 = vmatpush1.msra.mxu0 0.0
    %1409 = vmatprep.subr.mxu0 0.0
    %1410 = vmatpush1.msra.mxu0 0.0
    %1411 = vmatprep.subr.mxu0 0.0
    %1412 = vmatpush1.msra.mxu0 0.0
    %1413 = vmatprep.subr.mxu0 0.0
    %1414 = vmatpush1.msra.mxu0 0.0
    %1415 = vmatprep.subr.mxu0 0.0
    %1416 = vmatpush1.msra.mxu0 0.0
    %1417 = vmatprep.subr.mxu0 0.0
    %1418 = vmatpush1.msra.mxu0 0.0
    %1419 = vmatprep.subr.mxu0 0.0
    %1420 = vmatpush1.msra.mxu0 0.0
    %1421 = vmatprep.subr.mxu0 0.0
    %1422 = vmatpush1.msra.mxu0 0.0
    %1423 = vmatprep.subr.mxu0 0.0
    %1424 = vmatpush1.msra.mxu0 0.0
    %1425 = vmatprep.subr.mxu0 0.0
    %1426 = vmatpush1.msra.mxu0 0.0
    %1427 = vmatprep.subr.mxu0 0.0
    %1428 = vmatpush1.msra.mxu0 0.0
    %1429 = vmatprep.subr.mxu0 0.0
    %1430 = vmatpush1.msra.mxu0 0.0
    %1431 = vmatprep.subr.mxu0 0.0
    %1432 = vmatpush1.msra.mxu0 0.0
    %1433 = vmatprep.subr.mxu0 0.0
    %1434 = vmatpush1.msra.mxu0 0.0
    %1435 = vmatprep.subr.mxu0 0.0
    %1436 = vmatpush1.msra.mxu0 0.0
    %1437 = vmatprep.subr.mxu0 0.0
    %1438 = vmatpush1.msra.mxu0 0.0
    %1439 = vmatprep.subr.mxu0 0.0
    %1440 = vmatpush1.msra.mxu0 0.0
    %1441 = vmatprep.mubr.f32.mxu0 0.0
    %1442 = vmatmul.mubr.f32.gmra.mrb[0].mxu0 %v1375
    %v1443 = vpop.f32.mrb[0].mxu0
    %v1444 = vadd.f32 %v1367, %v1443
    %v1445 = vpop.f32.mrb[0].mxu0
    %v1446 = vadd.f32 %v1371, %v1445
    %1447 = vdwg.mxu0
    %v1448 = vmax.f32 %v1444, 0.0
    %v1449 = vmax.f32 %v1446, 0.0
    %v1450 = vld [vmem:[%s5] sm:$0xff]
    %v1451 = vld [vmem:[%s5 + $0x8] sm:$0xff]
    %v1452 = vld [vmem:[%s5 + $0x10] sm:$0xff]
    %v1453 = vld [vmem:[%s5 + $0x18] sm:$0xff]
    %v1454 = vld [vmem:[%s5 + $0x20] sm:$0xff]
    %v1455 = vld [vmem:[%s5 + $0x28] sm:$0xff]
    %v1456 = vld [vmem:[%s5 + $0x30] sm:$0xff]
    %v1457 = vld [vmem:[%s5 + $0x38] sm:$0xff]
    %v1458 = vld [vmem:[%s5 + $0x40] sm:$0xff]
    %v1459 = vld [vmem:[%s5 + $0x48] sm:$0xff]
    %v1460 = vld [vmem:[%s5 + $0x50] sm:$0xff]
    %v1461 = vld [vmem:[%s5 + $0x58] sm:$0xff]
    %v1462 = vld [vmem:[%s5 + $0x60] sm:$0xff]
    %v1463 = vld [vmem:[%s5 + $0x68] sm:$0xff]
    %v1464 = vld [vmem:[%s5 + $0x70] sm:$0xff]
    %v1465 = vld [vmem:[%s5 + $0x78] sm:$0xff]
    %v1466 = vld [vmem:[%s5 + $0x80] sm:$0xff]
    %v1467 = vld [vmem:[%s5 + $0x88] sm:$0xff]
    %v1468 = vld [vmem:[%s5 + $0x90] sm:$0xff]
    %v1469 = vld [vmem:[%s5 + $0x98] sm:$0xff]
    %v1470 = vld [vmem:[%s5 + $0xa0] sm:$0xff]
    %v1471 = vld [vmem:[%s5 + $0xa8] sm:$0xff]
    %v1472 = vld [vmem:[%s5 + $0xb0] sm:$0xff]
    %v1473 = vld [vmem:[%s5 + $0xb8] sm:$0xff]
    %v1474 = vld [vmem:[%s6 + $0x13] sm:$0x1]
    %v1476 = vlaneseq
    %v1477 = vshrl.u32 %v1476, 7
    %v1478 = vsub.s32 0, %v1477
    %v1479 = vrot.slane %v1474, %v1478
    %v1482 = vsel %vm317, %v1449, 0
    %1484 = vmatprep.subr.mxu0 0.0
    %1485 = vmatpush1.msra.mxu0 %v1450
    %1486 = vmatprep.subr.mxu0 0.0
    %1487 = vmatpush1.msra.mxu0 %v1451
    %1488 = vmatprep.subr.mxu0 0.0
    %1489 = vmatpush1.msra.mxu0 %v1452
    %1490 = vmatprep.subr.mxu0 0.0
    %1491 = vmatpush1.msra.mxu0 %v1453
    %1492 = vmatprep.subr.mxu0 0.0
    %1493 = vmatpush1.msra.mxu0 %v1454
    %1494 = vmatprep.subr.mxu0 0.0
    %1495 = vmatpush1.msra.mxu0 %v1455
    %1496 = vmatprep.subr.mxu0 0.0
    %1497 = vmatpush1.msra.mxu0 %v1456
    %1498 = vmatprep.subr.mxu0 0.0
    %1499 = vmatpush1.msra.mxu0 %v1457
    %1500 = vmatprep.subr.mxu0 0.0
    %1501 = vmatpush1.msra.mxu0 %v1458
    %1502 = vmatprep.subr.mxu0 0.0
    %1503 = vmatpush1.msra.mxu0 %v1459
    %1504 = vmatprep.subr.mxu0 0.0
    %1505 = vmatpush1.msra.mxu0 %v1460
    %1506 = vmatprep.subr.mxu0 0.0
    %1507 = vmatpush1.msra.mxu0 %v1461
    %1508 = vmatprep.subr.mxu0 0.0
    %1509 = vmatpush1.msra.mxu0 %v1462
    %1510 = vmatprep.subr.mxu0 0.0
    %1511 = vmatpush1.msra.mxu0 %v1463
    %1512 = vmatprep.subr.mxu0 0.0
    %1513 = vmatpush1.msra.mxu0 %v1464
    %1514 = vmatprep.subr.mxu0 0.0
    %1515 = vmatpush1.msra.mxu0 %v1465
    %1516 = vmatprep.subr.mxu0 0.0
    %1517 = vmatpush1.msra.mxu0 %v1466
    %1518 = vmatprep.subr.mxu0 0.0
    %1519 = vmatpush1.msra.mxu0 %v1467
    %1520 = vmatprep.subr.mxu0 0.0
    %1521 = vmatpush1.msra.mxu0 %v1468
    %1522 = vmatprep.subr.mxu0 0.0
    %1523 = vmatpush1.msra.mxu0 %v1469
    %1524 = vmatprep.subr.mxu0 0.0
    %1525 = vmatpush1.msra.mxu0 %v1470
    %1526 = vmatprep.subr.mxu0 0.0
    %1527 = vmatpush1.msra.mxu0 %v1471
    %1528 = vmatprep.subr.mxu0 0.0
    %1529 = vmatpush1.msra.mxu0 %v1472
    %1530 = vmatprep.subr.mxu0 0.0
    %1531 = vmatpush1.msra.mxu0 %v1473
    %1532 = vmatprep.subr.mxu0 0.0
    %1533 = vmatpush1.msra.mxu0 0.0
    %1534 = vmatprep.subr.mxu0 0.0
    %1535 = vmatpush1.msra.mxu0 0.0
    %1536 = vmatprep.subr.mxu0 0.0
    %1537 = vmatpush1.msra.mxu0 0.0
    %1538 = vmatprep.subr.mxu0 0.0
    %1539 = vmatpush1.msra.mxu0 0.0
    %1540 = vmatprep.subr.mxu0 0.0
    %1541 = vmatpush1.msra.mxu0 0.0
    %1542 = vmatprep.subr.mxu0 0.0
    %1543 = vmatpush1.msra.mxu0 0.0
    %1544 = vmatprep.subr.mxu0 0.0
    %1545 = vmatpush1.msra.mxu0 0.0
    %1546 = vmatprep.subr.mxu0 0.0
    %1547 = vmatpush1.msra.mxu0 0.0
    %1548 = vmatprep.mubr.f32.mxu0 %v1482
    %1549 = vmatmul.mubr.f32.gmra.mrb[0].mxu0 %v1448
    %v1550 = vpop.f32.mrb[0].mxu0
    %v1551 = vadd.f32 %v1479, %v1550
    %v1552 = vpop.f32.mrb[0].mxu0
    %1553 = vdwg.mxu0
    %v1554 = vlaneseq
    %v1555 = vand.u32 %v1554, 127
    %vm1556 = vcmp.lt.s32.totalorder %v1555, 8
    %vm1557 = vcmp.ge.s32.totalorder %v1555, 8
    %vm1558 = vcmp.lt.s32.totalorder %v1555, 16
    %vm1559 = vmand %vm1557, %vm1558
    %1560 = vset.pattern.permute.xlu0 12
    %1561 = vperm.xlu0 %1560, %v34
    %v1562 = vpop.permute.xlu0 %1561
    %vm1563 = vcmp.le.s32.totalorder %v1555, %v1562
    %vm1564 = vmand %vm1556, %vm1563
    %v1565 = vsub.s32 %v1555, 8
    %1566 = vset.pattern.permute.xlu0 13
    %1567 = vperm.xlu0 %1566, %v34
    %v1568 = vpop.permute.xlu0 %1567
    %vm1569 = vcmp.le.s32.totalorder %v1565, %v1568
    %vm1570 = vmand %vm1559, %vm1569
    %vm1571 = vmor %vm1564, %vm1570
    %vm1572 = vmxor %vm1556, 1
    %vm1573 = vmxor %vm1559, 1
    %vm1574 = vmand %vm1572, %vm1573
    %vm1575 = vmor %vm1571, %vm1574
    %v1576 = vsel %vm1575, %v1551, -1e+09
    %1577 = vst [vmem:[#allocation2] sm:$0xff] %v1576
    // Predicated region
    $region38: #{tpu_custom_call.1} parent=1 // pred_check
      _
    $region39: #{tpu_custom_call.1} parent=1 // pred_check_branch
      %1579 = sbr.rel (0) target = $region41
    $region40: #{tpu_custom_call.1} parent=1 // pred_region
      %s1581 = ssub.s32 128, 128
      %1582 = vsyncadd [#allocation3], %s1581
      %s1584 = sshll.u32 [#allocation2], 4
      %s1585 = int_to_ptr.vmem [resolvable:$true] %s1584
      %1587 = dma.vmem_to_hbm [thread:$0]  %s1585, 128, %s9, [#allocation3]
    $region41: #{tpu_custom_call.1} parent=1 // pred_fallthru
      _
    // Predicated region
    $region42: #{tpu_custom_call.1} parent=1 // pred_check
      _
    $region43: #{tpu_custom_call.1} parent=1 // pred_check_branch
      %1589 = sbr.rel (0) target = $region45
    $region44: #{tpu_custom_call.1} parent=1 // pred_region
      %1590 = dma.done [#allocation3], 128
    $region45: #{tpu_custom_call.1} parent=1 // pred_fallthru
      _
    %1591 = vsyncpa [#allocation3], 1

</llo_original>
